<compile_context>
chip_gen: v6e
topology: v6e:2x2x1
jax: 0.10.0
libtpu: 0.0.40
codegen_flags: <defaults>
</compile_context>

<pallas_src>
from functools import partial

import jax
import jax.numpy as jnp
from jax.experimental import pallas as pl
from jax.experimental.pallas import tpu as pltpu


# ---------------------------------------------------------------------------
# Fused forward kernel: one grid step == one batch element.
# ---------------------------------------------------------------------------
def _fused_mha_kernel(q_ref, mask_ref, w_qkv_ref, b_qkv_ref, w_proj_ref,
                      b_proj_ref, out_ref, attn_ref, *, n_head, inv_temper):
    # q_ref:     [T, D]         activations for this batch element
    # mask_ref:  [T, T]         float mask; NONZERO == masked out
    # w_qkv_ref: [D, 3D]        resident in VMEM across the whole grid
    # b_qkv_ref: [1, 3D]
    # w_proj_ref:[D, D]
    # b_proj_ref:[1, D]
    # out_ref:   [T, D]
    # attn_ref:  [H, 1, T, T]   per-head attention probabilities
    q = q_ref[...]
    T, D = q.shape
    d_k = D // n_head

    # Combined QKV projection: [T, D] @ [D, 3D] + b -> [T, 3D]
    qkv = (jnp.dot(q, w_qkv_ref[...], preferred_element_type=jnp.float32)
           + b_qkv_ref[...])

    masked = mask_ref[...] != 0.0            # [T, T] bool

    proj_acc = None
    for h in range(n_head):                  # n_head is small; unrolled trace
        lo = h * d_k
        q_h = qkv[:, lo:lo + d_k]            # [T, d_k]
        k_h = qkv[:, D + lo:D + lo + d_k]    # [T, d_k]
        v_h = qkv[:, 2 * D + lo:2 * D + lo + d_k]

        # scores = q_h @ k_h^T / temper  (contract on d_k, no explicit k^T)
        s = jax.lax.dot_general(
            q_h, k_h, dimension_numbers=(((1,), (1,)), ((), ())),
            preferred_element_type=jnp.float32) * inv_temper
        s = jnp.where(masked, -1e18, s)      # torch.masked_fill(mask, -1e18)

        # softmax over keys (== BottleSoftmax(dim=1) on [HB, Tq, Tk])
        s_max = jnp.max(s, axis=-1, keepdims=True)
        e = jnp.exp(s - s_max)
        p = e / jnp.sum(e, axis=-1, keepdims=True)
        # TODO(synk): training-mode attention dropout (p=0.1) not implemented.

        attn_ref[h, 0, :, :] = p

        o_h = jnp.dot(p, v_h, preferred_element_type=jnp.float32)   # [T, d_k]
        # Fold head-concat + output projection:
        #   concat_h(o_h) @ W_proj == sum_h o_h @ W_proj[h*d_k:(h+1)*d_k, :]
        contrib = jnp.dot(o_h, w_proj_ref[lo:lo + d_k, :],
                          preferred_element_type=jnp.float32)
        proj_acc = contrib if proj_acc is None else proj_acc + contrib

    out_ref[...] = (proj_acc + b_proj_ref[...]).astype(out_ref.dtype)


# ---------------------------------------------------------------------------
# Module forward: a single fused pallas_call gridded over batch.
# ---------------------------------------------------------------------------
def my_multi_head_attention(params, q, k, v, mask):
    """q/k/v: [B, T, D] (k, v ignored as in the PyTorch module); mask: [B, T, T]."""
    del k, v  # the PyTorch forward ignores its k/v arguments
    B, T, D = q.shape
    n_head = int(params["n_head"])
    temper = float(D) ** 0.5                 # ScaledDotProductAttention(model_dim)

    kernel = partial(_fused_mha_kernel, n_head=n_head,
                     inv_temper=float(1.0 / temper))

    # One-time weight layout prep (tiny; PyTorch Linear stores [out, in]).
    w_qkv_t = params["w_qkv"].T              # [D, 3D]
    b_qkv = params["b_qkv"].reshape(1, 3 * D)
    w_proj_t = params["w_proj"].T            # [D, D]
    b_proj = params["b_proj"].reshape(1, D)

    out, attns = pl.pallas_call(
        kernel,
        out_shape=(
            jax.ShapeDtypeStruct((B, T, D), jnp.float32),
            jax.ShapeDtypeStruct((n_head, B, T, T), jnp.float32),
        ),
        grid=(B,),
        in_specs=[
            pl.BlockSpec((None, T, D), lambda b: (b, 0, 0)),          # q[b]
            pl.BlockSpec((None, T, T), lambda b: (b, 0, 0)),          # mask[b]
            pl.BlockSpec((D, 3 * D), lambda b: (0, 0)),               # resident W_qkv
            pl.BlockSpec((1, 3 * D), lambda b: (0, 0)),               # resident b_qkv
            pl.BlockSpec((D, D), lambda b: (0, 0)),                   # resident W_proj
            pl.BlockSpec((1, D), lambda b: (0, 0)),                   # resident b_proj
        ],
        out_specs=(
            pl.BlockSpec((None, T, D), lambda b: (b, 0, 0)),          # out[b]
            pl.BlockSpec((n_head, 1, T, T), lambda b: (0, b, 0, 0)),  # attns[:, b]
        ),
        compiler_params=pltpu.CompilerParams(
            dimension_semantics=("parallel",)),   # shards over 2 TCs on v7x
    )(q, mask, w_qkv_t, b_qkv, w_proj_t, b_proj)

    # [H, B, T, T] -> [H*B, T, T]; free reshape, matches mask.repeat ordering.
    return out, attns.reshape(n_head * B, T, T)


# ---------------------------------------------------------------------------
# Pure-JAX reference (mirrors the PyTorch ops) for a loose smoke check.
# ---------------------------------------------------------------------------
def _reference_forward(params, q, mask):
    B, T, D = q.shape
    H = int(params["n_head"])
    d_k = D // H
    temper = float(D) ** 0.5
    qkv = q @ params["w_qkv"].T + params["b_qkv"]
    q_c, k_c, v_c = jnp.split(qkv, 3, axis=-1)

    def to_heads(x):
        x = x.reshape(B, T, H, d_k)
        return jnp.transpose(x, (2, 0, 1, 3)).reshape(H * B, T, d_k)

    q_s, k_s, v_s = to_heads(q_c), to_heads(k_c), to_heads(v_c)
    m = jnp.tile(mask, (H, 1, 1))
    s = jnp.einsum("btd,bsd->bts", q_s, k_s) / temper
    s = jnp.where(m != 0.0, -1e18, s)
    p = jax.nn.softmax(s, axis=-1)
    o = jnp.einsum("bts,bsd->btd", p, v_s)
    o = jnp.transpose(o.reshape(H, B, T, d_k), (1, 2, 0, 3)).reshape(B, T, D)
    out = o @ params["w_proj"].T + params["b_proj"]
    return out, p


# ---------------------------------------------------------------------------
# Deterministic parameter init (mimics nn.init.orthogonal)
# ---------------------------------------------------------------------------
def orthogonal_init(key, shape):
    rows, cols = shape
    big, small = max(rows, cols), min(rows, cols)
    a = jax.random.normal(key, (big, small), dtype=jnp.float32)
    qm, r = jnp.linalg.qr(a)
    qm = qm * jnp.sign(jnp.diagonal(r))
    if rows < cols:
        qm = qm.T
    return qm[:rows, :cols]


if __name__ == "__main__":
    B, T, D, H = 2, 8, 32, 4

    key = jax.random.PRNGKey(0)
    k1, k2, k3, k4, k5 = jax.random.split(key, 5)
    params = {
        "n_head": H,
        # PyTorch Linear weights are [out_features, in_features]
        "w_qkv": orthogonal_init(k1, (3 * D, D)),
        "b_qkv": 0.01 * jax.random.normal(k2, (3 * D,), dtype=jnp.float32),
        "w_proj": orthogonal_init(k3, (D, D)),
        "b_proj": 0.01 * jax.random.normal(k4, (D,), dtype=jnp.float32),
    }

    q_in = jax.random.normal(k5, (B, T, D), dtype=jnp.float32)
    k_in = q_in
    v_in = q_in
    # causal mask: nonzero (upper triangle) = masked out
    mask = jnp.broadcast_to(jnp.triu(jnp.ones((T, T), jnp.float32), k=1), (B, T, T))

    out, attns = my_multi_head_attention(params, q_in, k_in, v_in, mask)
    jax.block_until_ready(out)
    jax.block_until_ready(attns)

    assert out.shape == (B, T, D)
    assert attns.shape == (H * B, T, T)

    # Loose smoke check vs. pure-JAX reference (tolerant of MXU pass precision).
    out_ref, attns_ref = _reference_forward(params, q_in, mask)
    assert bool(jnp.allclose(out, out_ref, rtol=5e-2, atol=5e-2))
    assert bool(jnp.allclose(attns, attns_ref, rtol=5e-2, atol=5e-2))

    print("KERNEL_OK")
</pallas_src>

<mosaic_0001>
module attributes {stable_mosaic.version = 11 : i64} {
  func.func @_fused_mha_kernel(%arg0: i32, %arg1: memref<1x8x32xf32, #tpu.memory_space<vmem>>, %arg2: memref<1x8x8xf32, #tpu.memory_space<vmem>>, %arg3: memref<32x96xf32, #tpu.memory_space<vmem>>, %arg4: memref<1x96xf32, #tpu.memory_space<vmem>>, %arg5: memref<32x32xf32, #tpu.memory_space<vmem>>, %arg6: memref<1x32xf32, #tpu.memory_space<vmem>>, %arg7: memref<1x8x32xf32, #tpu.memory_space<vmem>>, %arg8: memref<4x1x8x8xf32, #tpu.memory_space<vmem>>) attributes {dimension_semantics = [#tpu.dimension_semantics<parallel>], iteration_bounds = array<i64: 2>, scalar_prefetch = 0 : i64, scratch_operands = 0 : i64, tpu.core_type = #tpu.core_type<tc>, window_params = [{transform_indices = @transform_0, window_bounds = array<i64: 1, 8, 32>}, {transform_indices = @transform_1, window_bounds = array<i64: 1, 8, 8>}, {pipeline_mode = #tpu.pipeline_mode<synchronous>, transform_indices = @transform_2, window_bounds = array<i64: 32, 96>}, {pipeline_mode = #tpu.pipeline_mode<synchronous>, transform_indices = @transform_3, window_bounds = array<i64: 1, 96>}, {pipeline_mode = #tpu.pipeline_mode<synchronous>, transform_indices = @transform_4, window_bounds = array<i64: 32, 32>}, {pipeline_mode = #tpu.pipeline_mode<synchronous>, transform_indices = @transform_5, window_bounds = array<i64: 1, 32>}, {transform_indices = @transform_6, window_bounds = array<i64: 1, 8, 32>}, {transform_indices = @transform_7, window_bounds = array<i64: 4, 1, 8, 8>}]} {
    %c0 = arith.constant 0 : index
    %c0_0 = arith.constant 0 : index
    %c0_1 = arith.constant 0 : index
    %0 = vector.load %arg1[%c0, %c0_0, %c0_1] : memref<1x8x32xf32, #tpu.memory_space<vmem>>, vector<1x8x32xf32>
    %1 = vector.shape_cast %0 : vector<1x8x32xf32> to vector<8x32xf32>
    %c0_2 = arith.constant 0 : index
    %c0_3 = arith.constant 0 : index
    %2 = vector.load %arg3[%c0_2, %c0_3] : memref<32x96xf32, #tpu.memory_space<vmem>>, vector<32x96xf32>
    %cst = arith.constant dense<0.000000e+00> : vector<8x96xf32>
    %3 = tpu.matmul %1, %2, %cst {dimension_numbers = #tpu.dot_dimension_numbers<[1], [0], [0], [1], [0, 0, 1, 1], [], []>} : vector<8x32xf32>, vector<32x96xf32>, vector<8x96xf32> -> vector<8x96xf32>
    %c0_4 = arith.constant 0 : index
    %c0_5 = arith.constant 0 : index
    %4 = vector.load %arg4[%c0_4, %c0_5] : memref<1x96xf32, #tpu.memory_space<vmem>>, vector<1x96xf32>
    %5 = vector.broadcast %4 : vector<1x96xf32> to vector<8x96xf32>
    %6 = arith.addf %3, %5 : vector<8x96xf32>
    %c0_6 = arith.constant 0 : index
    %c0_7 = arith.constant 0 : index
    %c0_8 = arith.constant 0 : index
    %7 = vector.load %arg2[%c0_6, %c0_7, %c0_8] : memref<1x8x8xf32, #tpu.memory_space<vmem>>, vector<1x8x8xf32>
    %8 = vector.shape_cast %7 : vector<1x8x8xf32> to vector<8x8xf32>
    %cst_9 = arith.constant 0.000000e+00 : f32
    %9 = vector.broadcast %cst_9 : f32 to vector<8x8xf32>
    %10 = arith.cmpf one, %8, %9 : vector<8x8xf32>
    %11 = vector.extract_strided_slice %6 {offsets = [0, 0], sizes = [8, 8], strides = [1, 1]} : vector<8x96xf32> to vector<8x8xf32>
    %12 = vector.extract_strided_slice %6 {offsets = [0, 32], sizes = [8, 8], strides = [1, 1]} : vector<8x96xf32> to vector<8x8xf32>
    %13 = vector.extract_strided_slice %6 {offsets = [0, 64], sizes = [8, 8], strides = [1, 1]} : vector<8x96xf32> to vector<8x8xf32>
    %cst_10 = arith.constant dense<0.000000e+00> : vector<8x8xf32>
    %14 = tpu.matmul %11, %12, %cst_10 {dimension_numbers = #tpu.dot_dimension_numbers<[1], [1], [0], [0], [0, 0, 1, 0], [], []>} : vector<8x8xf32>, vector<8x8xf32>, vector<8x8xf32> -> vector<8x8xf32>
    %cst_11 = arith.constant 0.176776692 : f32
    %15 = vector.broadcast %cst_11 : f32 to vector<8x8xf32>
    %16 = arith.mulf %14, %15 : vector<8x8xf32>
    %cst_12 = arith.constant -9.99999984E+17 : f32
    %17 = vector.broadcast %cst_12 : f32 to vector<8x8xf32>
    %18 = arith.select %10, %17, %16 : vector<8x8xi1>, vector<8x8xf32>
    %cst_13 = arith.constant dense<0xFF800000> : vector<8xf32>
    %19 = vector.multi_reduction <maximumf>, %18, %cst_13 [1] : vector<8x8xf32> to vector<8xf32>
    %20 = vector.shape_cast %19 : vector<8xf32> to vector<8x1xf32>
    %21 = vector.broadcast %20 : vector<8x1xf32> to vector<8x8xf32>
    %22 = arith.subf %18, %21 : vector<8x8xf32>
    %23 = math.exp %22 : vector<8x8xf32>
    %cst_14 = arith.constant dense<0.000000e+00> : vector<8xf32>
    %24 = vector.multi_reduction <add>, %23, %cst_14 [1] : vector<8x8xf32> to vector<8xf32>
    %25 = vector.shape_cast %24 : vector<8xf32> to vector<8x1xf32>
    %26 = vector.broadcast %25 : vector<8x1xf32> to vector<8x8xf32>
    %27 = arith.divf %23, %26 : vector<8x8xf32>
    %c0_15 = arith.constant 0 : index
    %c0_16 = arith.constant 0 : index
    %c0_17 = arith.constant 0 : index
    %c0_18 = arith.constant 0 : index
    %28 = vector.load %arg8[%c0_15, %c0_16, %c0_17, %c0_18] : memref<4x1x8x8xf32, #tpu.memory_space<vmem>>, vector<1x1x8x8xf32>
    %29 = vector.shape_cast %28 : vector<1x1x8x8xf32> to vector<8x8xf32>
    %30 = vector.shape_cast %27 : vector<8x8xf32> to vector<1x1x8x8xf32>
    tpu.vector_store %arg8[%c0_15, %c0_16, %c0_17, %c0_18], %30 {strides = array<i32>} : memref<4x1x8x8xf32, #tpu.memory_space<vmem>>, vector<1x1x8x8xf32>,
    %cst_19 = arith.constant dense<0.000000e+00> : vector<8x8xf32>
    %31 = tpu.matmul %27, %13, %cst_19 {dimension_numbers = #tpu.dot_dimension_numbers<[1], [0], [0], [1], [0, 0, 1, 1], [], []>} : vector<8x8xf32>, vector<8x8xf32>, vector<8x8xf32> -> vector<8x8xf32>
    %c0_20 = arith.constant 0 : index
    %c0_21 = arith.constant 0 : index
    %32 = vector.load %arg5[%c0_20, %c0_21] : memref<32x32xf32, #tpu.memory_space<vmem>>, vector<8x32xf32>
    %cst_22 = arith.constant dense<0.000000e+00> : vector<8x32xf32>
    %33 = tpu.matmul %31, %32, %cst_22 {dimension_numbers = #tpu.dot_dimension_numbers<[1], [0], [0], [1], [0, 0, 1, 1], [], []>} : vector<8x8xf32>, vector<8x32xf32>, vector<8x32xf32> -> vector<8x32xf32>
    %34 = vector.extract_strided_slice %6 {offsets = [0, 8], sizes = [8, 8], strides = [1, 1]} : vector<8x96xf32> to vector<8x8xf32>
    %35 = vector.extract_strided_slice %6 {offsets = [0, 40], sizes = [8, 8], strides = [1, 1]} : vector<8x96xf32> to vector<8x8xf32>
    %36 = vector.extract_strided_slice %6 {offsets = [0, 72], sizes = [8, 8], strides = [1, 1]} : vector<8x96xf32> to vector<8x8xf32>
    %cst_23 = arith.constant dense<0.000000e+00> : vector<8x8xf32>
    %37 = tpu.matmul %34, %35, %cst_23 {dimension_numbers = #tpu.dot_dimension_numbers<[1], [1], [0], [0], [0, 0, 1, 0], [], []>} : vector<8x8xf32>, vector<8x8xf32>, vector<8x8xf32> -> vector<8x8xf32>
    %cst_24 = arith.constant 0.176776692 : f32
    %38 = vector.broadcast %cst_24 : f32 to vector<8x8xf32>
    %39 = arith.mulf %37, %38 : vector<8x8xf32>
    %cst_25 = arith.constant -9.99999984E+17 : f32
    %40 = vector.broadcast %cst_25 : f32 to vector<8x8xf32>
    %41 = arith.select %10, %40, %39 : vector<8x8xi1>, vector<8x8xf32>
    %cst_26 = arith.constant dense<0xFF800000> : vector<8xf32>
    %42 = vector.multi_reduction <maximumf>, %41, %cst_26 [1] : vector<8x8xf32> to vector<8xf32>
    %43 = vector.shape_cast %42 : vector<8xf32> to vector<8x1xf32>
    %44 = vector.broadcast %43 : vector<8x1xf32> to vector<8x8xf32>
    %45 = arith.subf %41, %44 : vector<8x8xf32>
    %46 = math.exp %45 : vector<8x8xf32>
    %cst_27 = arith.constant dense<0.000000e+00> : vector<8xf32>
    %47 = vector.multi_reduction <add>, %46, %cst_27 [1] : vector<8x8xf32> to vector<8xf32>
    %48 = vector.shape_cast %47 : vector<8xf32> to vector<8x1xf32>
    %49 = vector.broadcast %48 : vector<8x1xf32> to vector<8x8xf32>
    %50 = arith.divf %46, %49 : vector<8x8xf32>
    %c1 = arith.constant 1 : index
    %c0_28 = arith.constant 0 : index
    %c0_29 = arith.constant 0 : index
    %c0_30 = arith.constant 0 : index
    %51 = vector.load %arg8[%c1, %c0_28, %c0_29, %c0_30] : memref<4x1x8x8xf32, #tpu.memory_space<vmem>>, vector<1x1x8x8xf32>
    %52 = vector.shape_cast %51 : vector<1x1x8x8xf32> to vector<8x8xf32>
    %53 = vector.shape_cast %50 : vector<8x8xf32> to vector<1x1x8x8xf32>
    tpu.vector_store %arg8[%c1, %c0_28, %c0_29, %c0_30], %53 {strides = array<i32>} : memref<4x1x8x8xf32, #tpu.memory_space<vmem>>, vector<1x1x8x8xf32>,
    %cst_31 = arith.constant dense<0.000000e+00> : vector<8x8xf32>
    %54 = tpu.matmul %50, %36, %cst_31 {dimension_numbers = #tpu.dot_dimension_numbers<[1], [0], [0], [1], [0, 0, 1, 1], [], []>} : vector<8x8xf32>, vector<8x8xf32>, vector<8x8xf32> -> vector<8x8xf32>
    %c8 = arith.constant 8 : index
    %c0_32 = arith.constant 0 : index
    %55 = vector.load %arg5[%c8, %c0_32] : memref<32x32xf32, #tpu.memory_space<vmem>>, vector<8x32xf32>
    %cst_33 = arith.constant dense<0.000000e+00> : vector<8x32xf32>
    %56 = tpu.matmul %54, %55, %cst_33 {dimension_numbers = #tpu.dot_dimension_numbers<[1], [0], [0], [1], [0, 0, 1, 1], [], []>} : vector<8x8xf32>, vector<8x32xf32>, vector<8x32xf32> -> vector<8x32xf32>
    %57 = arith.addf %33, %56 : vector<8x32xf32>
    %58 = vector.extract_strided_slice %6 {offsets = [0, 16], sizes = [8, 8], strides = [1, 1]} : vector<8x96xf32> to vector<8x8xf32>
    %59 = vector.extract_strided_slice %6 {offsets = [0, 48], sizes = [8, 8], strides = [1, 1]} : vector<8x96xf32> to vector<8x8xf32>
    %60 = vector.extract_strided_slice %6 {offsets = [0, 80], sizes = [8, 8], strides = [1, 1]} : vector<8x96xf32> to vector<8x8xf32>
    %cst_34 = arith.constant dense<0.000000e+00> : vector<8x8xf32>
    %61 = tpu.matmul %58, %59, %cst_34 {dimension_numbers = #tpu.dot_dimension_numbers<[1], [1], [0], [0], [0, 0, 1, 0], [], []>} : vector<8x8xf32>, vector<8x8xf32>, vector<8x8xf32> -> vector<8x8xf32>
    %cst_35 = arith.constant 0.176776692 : f32
    %62 = vector.broadcast %cst_35 : f32 to vector<8x8xf32>
    %63 = arith.mulf %61, %62 : vector<8x8xf32>
    %cst_36 = arith.constant -9.99999984E+17 : f32
    %64 = vector.broadcast %cst_36 : f32 to vector<8x8xf32>
    %65 = arith.select %10, %64, %63 : vector<8x8xi1>, vector<8x8xf32>
    %cst_37 = arith.constant dense<0xFF800000> : vector<8xf32>
    %66 = vector.multi_reduction <maximumf>, %65, %cst_37 [1] : vector<8x8xf32> to vector<8xf32>
    %67 = vector.shape_cast %66 : vector<8xf32> to vector<8x1xf32>
    %68 = vector.broadcast %67 : vector<8x1xf32> to vector<8x8xf32>
    %69 = arith.subf %65, %68 : vector<8x8xf32>
    %70 = math.exp %69 : vector<8x8xf32>
    %cst_38 = arith.constant dense<0.000000e+00> : vector<8xf32>
    %71 = vector.multi_reduction <add>, %70, %cst_38 [1] : vector<8x8xf32> to vector<8xf32>
    %72 = vector.shape_cast %71 : vector<8xf32> to vector<8x1xf32>
    %73 = vector.broadcast %72 : vector<8x1xf32> to vector<8x8xf32>
    %74 = arith.divf %70, %73 : vector<8x8xf32>
    %c2 = arith.constant 2 : index
    %c0_39 = arith.constant 0 : index
    %c0_40 = arith.constant 0 : index
    %c0_41 = arith.constant 0 : index
    %75 = vector.load %arg8[%c2, %c0_39, %c0_40, %c0_41] : memref<4x1x8x8xf32, #tpu.memory_space<vmem>>, vector<1x1x8x8xf32>
    %76 = vector.shape_cast %75 : vector<1x1x8x8xf32> to vector<8x8xf32>
    %77 = vector.shape_cast %74 : vector<8x8xf32> to vector<1x1x8x8xf32>
    tpu.vector_store %arg8[%c2, %c0_39, %c0_40, %c0_41], %77 {strides = array<i32>} : memref<4x1x8x8xf32, #tpu.memory_space<vmem>>, vector<1x1x8x8xf32>,
    %cst_42 = arith.constant dense<0.000000e+00> : vector<8x8xf32>
    %78 = tpu.matmul %74, %60, %cst_42 {dimension_numbers = #tpu.dot_dimension_numbers<[1], [0], [0], [1], [0, 0, 1, 1], [], []>} : vector<8x8xf32>, vector<8x8xf32>, vector<8x8xf32> -> vector<8x8xf32>
    %c16 = arith.constant 16 : index
    %c0_43 = arith.constant 0 : index
    %79 = vector.load %arg5[%c16, %c0_43] : memref<32x32xf32, #tpu.memory_space<vmem>>, vector<8x32xf32>
    %cst_44 = arith.constant dense<0.000000e+00> : vector<8x32xf32>
    %80 = tpu.matmul %78, %79, %cst_44 {dimension_numbers = #tpu.dot_dimension_numbers<[1], [0], [0], [1], [0, 0, 1, 1], [], []>} : vector<8x8xf32>, vector<8x32xf32>, vector<8x32xf32> -> vector<8x32xf32>
    %81 = arith.addf %57, %80 : vector<8x32xf32>
    %82 = vector.extract_strided_slice %6 {offsets = [0, 24], sizes = [8, 8], strides = [1, 1]} : vector<8x96xf32> to vector<8x8xf32>
    %83 = vector.extract_strided_slice %6 {offsets = [0, 56], sizes = [8, 8], strides = [1, 1]} : vector<8x96xf32> to vector<8x8xf32>
    %84 = vector.extract_strided_slice %6 {offsets = [0, 88], sizes = [8, 8], strides = [1, 1]} : vector<8x96xf32> to vector<8x8xf32>
    %cst_45 = arith.constant dense<0.000000e+00> : vector<8x8xf32>
    %85 = tpu.matmul %82, %83, %cst_45 {dimension_numbers = #tpu.dot_dimension_numbers<[1], [1], [0], [0], [0, 0, 1, 0], [], []>} : vector<8x8xf32>, vector<8x8xf32>, vector<8x8xf32> -> vector<8x8xf32>
    %cst_46 = arith.constant 0.176776692 : f32
    %86 = vector.broadcast %cst_46 : f32 to vector<8x8xf32>
    %87 = arith.mulf %85, %86 : vector<8x8xf32>
    %cst_47 = arith.constant -9.99999984E+17 : f32
    %88 = vector.broadcast %cst_47 : f32 to vector<8x8xf32>
    %89 = arith.select %10, %88, %87 : vector<8x8xi1>, vector<8x8xf32>
    %cst_48 = arith.constant dense<0xFF800000> : vector<8xf32>
    %90 = vector.multi_reduction <maximumf>, %89, %cst_48 [1] : vector<8x8xf32> to vector<8xf32>
    %91 = vector.shape_cast %90 : vector<8xf32> to vector<8x1xf32>
    %92 = vector.broadcast %91 : vector<8x1xf32> to vector<8x8xf32>
    %93 = arith.subf %89, %92 : vector<8x8xf32>
    %94 = math.exp %93 : vector<8x8xf32>
    %cst_49 = arith.constant dense<0.000000e+00> : vector<8xf32>
    %95 = vector.multi_reduction <add>, %94, %cst_49 [1] : vector<8x8xf32> to vector<8xf32>
    %96 = vector.shape_cast %95 : vector<8xf32> to vector<8x1xf32>
    %97 = vector.broadcast %96 : vector<8x1xf32> to vector<8x8xf32>
    %98 = arith.divf %94, %97 : vector<8x8xf32>
    %c3 = arith.constant 3 : index
    %c0_50 = arith.constant 0 : index
    %c0_51 = arith.constant 0 : index
    %c0_52 = arith.constant 0 : index
    %99 = vector.load %arg8[%c3, %c0_50, %c0_51, %c0_52] : memref<4x1x8x8xf32, #tpu.memory_space<vmem>>, vector<1x1x8x8xf32>
    %100 = vector.shape_cast %99 : vector<1x1x8x8xf32> to vector<8x8xf32>
    %101 = vector.shape_cast %98 : vector<8x8xf32> to vector<1x1x8x8xf32>
    tpu.vector_store %arg8[%c3, %c0_50, %c0_51, %c0_52], %101 {strides = array<i32>} : memref<4x1x8x8xf32, #tpu.memory_space<vmem>>, vector<1x1x8x8xf32>,
    %cst_53 = arith.constant dense<0.000000e+00> : vector<8x8xf32>
    %102 = tpu.matmul %98, %84, %cst_53 {dimension_numbers = #tpu.dot_dimension_numbers<[1], [0], [0], [1], [0, 0, 1, 1], [], []>} : vector<8x8xf32>, vector<8x8xf32>, vector<8x8xf32> -> vector<8x8xf32>
    %c24 = arith.constant 24 : index
    %c0_54 = arith.constant 0 : index
    %103 = vector.load %arg5[%c24, %c0_54] : memref<32x32xf32, #tpu.memory_space<vmem>>, vector<8x32xf32>
    %cst_55 = arith.constant dense<0.000000e+00> : vector<8x32xf32>
    %104 = tpu.matmul %102, %103, %cst_55 {dimension_numbers = #tpu.dot_dimension_numbers<[1], [0], [0], [1], [0, 0, 1, 1], [], []>} : vector<8x8xf32>, vector<8x32xf32>, vector<8x32xf32> -> vector<8x32xf32>
    %105 = arith.addf %81, %104 : vector<8x32xf32>
    %c0_56 = arith.constant 0 : index
    %c0_57 = arith.constant 0 : index
    %106 = vector.load %arg6[%c0_56, %c0_57] : memref<1x32xf32, #tpu.memory_space<vmem>>, vector<1x32xf32>
    %107 = vector.broadcast %106 : vector<1x32xf32> to vector<8x32xf32>
    %108 = arith.addf %105, %107 : vector<8x32xf32>
    %c0_58 = arith.constant 0 : index
    %c0_59 = arith.constant 0 : index
    %c0_60 = arith.constant 0 : index
    %109 = vector.load %arg7[%c0_58, %c0_59, %c0_60] : memref<1x8x32xf32, #tpu.memory_space<vmem>>, vector<1x8x32xf32>
    %110 = vector.shape_cast %109 : vector<1x8x32xf32> to vector<8x32xf32>
    %111 = vector.shape_cast %108 : vector<8x32xf32> to vector<1x8x32xf32>
    tpu.vector_store %arg7[%c0_58, %c0_59, %c0_60], %111 {strides = array<i32>} : memref<1x8x32xf32, #tpu.memory_space<vmem>>, vector<1x8x32xf32>,
    return
  }
  func.func @transform_0(%arg0: i32) -> (i32, i32, i32) {
    %c0_i32 = arith.constant 0 : i32
    %c0_i32_0 = arith.constant 0 : i32
    %c0_i32_1 = arith.constant 0 : i32
    return %arg0, %c0_i32, %c0_i32_0 : i32, i32, i32
  }
  func.func @transform_1(%arg0: i32) -> (i32, i32, i32) {
    %c0_i32 = arith.constant 0 : i32
    %c0_i32_0 = arith.constant 0 : i32
    %c0_i32_1 = arith.constant 0 : i32
    return %arg0, %c0_i32, %c0_i32_0 : i32, i32, i32
  }
  func.func @transform_2(%arg0: i32) -> (i32, i32) {
    %c0_i32 = arith.constant 0 : i32
    %c0_i32_0 = arith.constant 0 : i32
    %c0_i32_1 = arith.constant 0 : i32
    return %c0_i32, %c0_i32_0 : i32, i32
  }
  func.func @transform_3(%arg0: i32) -> (i32, i32) {
    %c0_i32 = arith.constant 0 : i32
    %c0_i32_0 = arith.constant 0 : i32
    %c0_i32_1 = arith.constant 0 : i32
    return %c0_i32, %c0_i32_0 : i32, i32
  }
  func.func @transform_4(%arg0: i32) -> (i32, i32) {
    %c0_i32 = arith.constant 0 : i32
    %c0_i32_0 = arith.constant 0 : i32
    %c0_i32_1 = arith.constant 0 : i32
    return %c0_i32, %c0_i32_0 : i32, i32
  }
  func.func @transform_5(%arg0: i32) -> (i32, i32) {
    %c0_i32 = arith.constant 0 : i32
    %c0_i32_0 = arith.constant 0 : i32
    %c0_i32_1 = arith.constant 0 : i32
    return %c0_i32, %c0_i32_0 : i32, i32
  }
  func.func @transform_6(%arg0: i32) -> (i32, i32, i32) {
    %c0_i32 = arith.constant 0 : i32
    %c0_i32_0 = arith.constant 0 : i32
    %c0_i32_1 = arith.constant 0 : i32
    return %arg0, %c0_i32, %c0_i32_0 : i32, i32, i32
  }
  func.func @transform_7(%arg0: i32) -> (i32, i32, i32, i32) {
    %c0_i32 = arith.constant 0 : i32
    %c0_i32_0 = arith.constant 0 : i32
    %c0_i32_1 = arith.constant 0 : i32
    %c0_i32_2 = arith.constant 0 : i32
    return %c0_i32, %arg0, %c0_i32_0, %c0_i32_1 : i32, i32, i32, i32
  }
}

</mosaic_0001>

<llo_original>
// kernel: tpu_custom_call.1
$region0: #{tpu_custom_call.1}
  #allocation0 [shape = 'u32[]', space=smem, size = 0x4, offset = 0x4, fixed_abs, tag = 'smem constant byte address 0x4 - core index']
  #allocation1 [shape = 'u32[144,128]{1,0:T(1,128)}', space=vmem, size = 0x12000, scoped, tag = 'internal scratch']
  %s0 = inlined_call_operand.hbm [shape: f32[2,8,32], index: 0, kind: input, shape index: {}]
  %s1 = inlined_call_operand.hbm [shape: f32[2,8,8], index: 1, kind: input, shape index: {}]
  %s2 = inlined_call_operand.hbm [shape: f32[32,96], index: 2, kind: input, shape index: {}]
  %s3 = inlined_call_operand.vmem [shape: f32[1,96], index: 3, kind: input, shape index: {}]
  %s4 = inlined_call_operand.hbm [shape: f32[32,32], index: 4, kind: input, shape index: {}]
  %s5 = inlined_call_operand.vmem [shape: f32[1,32], index: 5, kind: input, shape index: {}]
  %s6 = inlined_call_operand.hbm [shape: f32[2,8,32], index: 6, kind: output, shape index: {0}]
  %s7 = inlined_call_operand.hbm [shape: f32[4,2,8,8], index: 7, kind: output, shape index: {1}]
  %8 = xla_tuple %s6, %s7
  %s9 = sld [smem:[#allocation0]]
  $region81: #{tpu_custom_call.1} parent=0
    _
  %s11 = ssub.s32 1, %s9
  %s12 = scalar_select 0, %s11, %s9
  $region1: #{tpu_custom_call.1} parent=0
    #allocation2 [shape = 'u8[8192]{0}', space=vmem, size = 0x2000, scoped, tag = 'input window, operand 0']
    #allocation3 [shape = 's32[2]{0}', space=sflag, size = 0x8, scoped, tag = 'scoped memory for tpu_custom_call.1']
    #allocation4 [shape = 's32[2]{0}', space=sflag, size = 0x8, scoped, tag = 'scoped memory for tpu_custom_call.1']
    #allocation5 [shape = 'u8[8192]{0}', space=vmem, size = 0x2000, scoped, tag = 'input window, operand 1']
    #allocation6 [shape = 's32[2]{0}', space=sflag, size = 0x8, scoped, tag = 'scoped memory for tpu_custom_call.1']
    #allocation7 [shape = 'u8[16384]{0}', space=vmem, size = 0x4000, scoped, tag = 'input window, operand 2, single buffered']
    #allocation8 [shape = 'u8[16384]{0}', space=vmem, size = 0x4000, scoped, tag = 'input window, operand 4, single buffered']
    #allocation9 [shape = 's32[1]{0}', space=sflag, size = 0x4, scoped, tag = 'scoped memory for tpu_custom_call.1']
    #allocation10 [shape = 'u8[8192]{0}', space=vmem, size = 0x2000, scoped, tag = 'output window, operand 0']
    #allocation11 [shape = 'u8[32768]{0}', space=vmem, size = 0x8000, scoped, tag = 'output window, operand 1']
    #allocation12 [shape = 's32[2]{0}', space=sflag, size = 0x8, scoped, tag = 'scoped memory for tpu_custom_call.1']
    %13 = vsyncpa [#allocation3], 0
    %s14 = scalar_lea.sflag [#allocation3], 1
    %15 = vsyncpa %s14, 0
    %16 = vsyncpa [#allocation6], 0
    %s17 = scalar_lea.sflag [#allocation6], 1
    %18 = vsyncpa %s17, 0
    %19 = vsyncpa [#allocation9], 0
    %20 = vsyncpa [#allocation4], 0
    %s21 = scalar_lea.sflag [#allocation4], 1
    %22 = vsyncpa %s21, 0
    %23 = vsyncpa [#allocation12], 0
    %s24 = scalar_lea.sflag [#allocation12], 1
    %25 = vsyncpa %s24, 0
    loop: start=0, step=1, limit=4
    $region2: #{tpu_custom_call.1} parent=1 // loop_pre_header
      _
    $region3: #{tpu_custom_call.1} parent=1 // loop_header
      %s27 = sphi 0, %s31
      %p28 = scmp.ge.s32.totalorder %s27, 4
      %s37 = sphi 0, %s39
      %s40 = sphi 0, %s37
      %s41 = sphi 0, %s40
      %s57 = sphi 0, %s41
      %s63 = sphi 0, %s65
      %s66 = sphi 0, %s63
      %s67 = sphi 0, %s66
      %s83 = sphi 0, %s67
      %s87 = sphi 0, %s87
      %s89 = sphi 0, %s87
      %s90 = sphi 0, %s89
      %s104 = sphi 0, %s90
      %s108 = sphi 0, %s108
      %s110 = sphi 0, %s108
      %s111 = sphi 0, %s110
      %s125 = sphi 0, %s111
      %s129 = sphi 0, %s129
      %s131 = sphi 0, %s129
      %s132 = sphi 0, %s131
      %s146 = sphi 0, %s132
      %s150 = sphi 0, %s150
      %s152 = sphi 0, %s150
      %s153 = sphi 0, %s152
      %s167 = sphi 0, %s153
      %s173 = sphi 0, %s175
      %s176 = sphi 0, %s173
      %s177 = sphi 0, %s176
      %s193 = sphi 0, %s177
      %s199 = sphi 0, %s201
      %s202 = sphi 0, %s199
      %s203 = sphi 0, %s202
      %s219 = sphi 0, %s203
    $region4: #{tpu_custom_call.1} parent=1 // loop_header_branch
      %30 = sbr.rel (%p28) target = $region8
    $region5: #{tpu_custom_call.1} parent=1 // loop_body
      %s32 = ssub.s32 %s27, 1
      %s33 = ssub.s32 %s27, 2
      %s34 = sadd.s32 %s27, 1
      %s35 = ssub.s32 %s27, %s34
      %p36 = scmp.eq.s32.totalorder %s35, 0
      %s38 = sadd.s32 %s37, 1
      %s39 = scalar_select %p36, %s37, %s38
      %p42 = pneg %p36
      %p43 = scmp.eq.s32.totalorder %s27, 1
      %p44 = por %p42, %p43
      %p45 = scmp.ne.s32.totalorder %s37, %s40
      %p46 = scmp.eq.s32.totalorder %s27, 0
      %p47 = por %p45, %p46
      %p48 = scmp.ne.s32.totalorder %s37, %s40
      %p49 = scmp.eq.s32.totalorder %s32, 1
      %p50 = por %p48, %p49
      %p51 = scmp.ne.s32.totalorder %s40, %s41
      %p52 = scmp.eq.s32.totalorder %s32, 0
      %p53 = por %p51, %p52
      %p54 = scmp.ne.s32.totalorder %s40, %s41
      %p55 = scmp.eq.s32.totalorder %s33, 1
      %p56 = por %p54, %p55
      %p58 = scmp.ne.s32.totalorder %s41, %s57
      %p59 = scmp.eq.s32.totalorder %s33, 0
      %p60 = por %p58, %p59
      %s61 = ssub.s32 %s27, %s34
      %p62 = scmp.eq.s32.totalorder %s61, 0
      %s64 = sadd.s32 %s63, 1
      %s65 = scalar_select %p62, %s63, %s64
      %p68 = pneg %p62
      %p69 = scmp.eq.s32.totalorder %s27, 1
      %p70 = por %p68, %p69
      %p71 = scmp.ne.s32.totalorder %s63, %s66
      %p72 = scmp.eq.s32.totalorder %s27, 0
      %p73 = por %p71, %p72
      %p74 = scmp.ne.s32.totalorder %s63, %s66
      %p75 = scmp.eq.s32.totalorder %s32, 1
      %p76 = por %p74, %p75
      %p77 = scmp.ne.s32.totalorder %s66, %s67
      %p78 = scmp.eq.s32.totalorder %s32, 0
      %p79 = por %p77, %p78
      %p80 = scmp.ne.s32.totalorder %s66, %s67
      %p81 = scmp.eq.s32.totalorder %s33, 1
      %p82 = por %p80, %p81
      %p84 = scmp.ne.s32.totalorder %s67, %s83
      %p85 = scmp.eq.s32.totalorder %s33, 0
      %p86 = por %p84, %p85
      %s88 = sadd.s32 %s87, 1
      %p91 = scmp.eq.s32.totalorder %s27, 1
      %p92 = scmp.ne.s32.totalorder %s87, %s89
      %p93 = scmp.eq.s32.totalorder %s27, 0
      %p94 = por %p92, %p93
      %p95 = scmp.ne.s32.totalorder %s87, %s89
      %p96 = scmp.eq.s32.totalorder %s32, 1
      %p97 = por %p95, %p96
      %p98 = scmp.ne.s32.totalorder %s89, %s90
      %p99 = scmp.eq.s32.totalorder %s32, 0
      %p100 = por %p98, %p99
      %p101 = scmp.ne.s32.totalorder %s89, %s90
      %p102 = scmp.eq.s32.totalorder %s33, 1
      %p103 = por %p101, %p102
      %p105 = scmp.ne.s32.totalorder %s90, %s104
      %p106 = scmp.eq.s32.totalorder %s33, 0
      %p107 = por %p105, %p106
      %s109 = sadd.s32 %s108, 1
      %p112 = scmp.eq.s32.totalorder %s27, 1
      %p113 = scmp.ne.s32.totalorder %s108, %s110
      %p114 = scmp.eq.s32.totalorder %s27, 0
      %p115 = por %p113, %p114
      %p116 = scmp.ne.s32.totalorder %s108, %s110
      %p117 = scmp.eq.s32.totalorder %s32, 1
      %p118 = por %p116, %p117
      %p119 = scmp.ne.s32.totalorder %s110, %s111
      %p120 = scmp.eq.s32.totalorder %s32, 0
      %p121 = por %p119, %p120
      %p122 = scmp.ne.s32.totalorder %s110, %s111
      %p123 = scmp.eq.s32.totalorder %s33, 1
      %p124 = por %p122, %p123
      %p126 = scmp.ne.s32.totalorder %s111, %s125
      %p127 = scmp.eq.s32.totalorder %s33, 0
      %p128 = por %p126, %p127
      %s130 = sadd.s32 %s129, 1
      %p133 = scmp.eq.s32.totalorder %s27, 1
      %p134 = scmp.ne.s32.totalorder %s129, %s131
      %p135 = scmp.eq.s32.totalorder %s27, 0
      %p136 = por %p134, %p135
      %p137 = scmp.ne.s32.totalorder %s129, %s131
      %p138 = scmp.eq.s32.totalorder %s32, 1
      %p139 = por %p137, %p138
      %p140 = scmp.ne.s32.totalorder %s131, %s132
      %p141 = scmp.eq.s32.totalorder %s32, 0
      %p142 = por %p140, %p141
      %p143 = scmp.ne.s32.totalorder %s131, %s132
      %p144 = scmp.eq.s32.totalorder %s33, 1
      %p145 = por %p143, %p144
      %p147 = scmp.ne.s32.totalorder %s132, %s146
      %p148 = scmp.eq.s32.totalorder %s33, 0
      %p149 = por %p147, %p148
      %s151 = sadd.s32 %s150, 1
      %p154 = scmp.eq.s32.totalorder %s27, 1
      %p155 = scmp.ne.s32.totalorder %s150, %s152
      %p156 = scmp.eq.s32.totalorder %s27, 0
      %p157 = por %p155, %p156
      %p158 = scmp.ne.s32.totalorder %s150, %s152
      %p159 = scmp.eq.s32.totalorder %s32, 1
      %p160 = por %p158, %p159
      %p161 = scmp.ne.s32.totalorder %s152, %s153
      %p162 = scmp.eq.s32.totalorder %s32, 0
      %p163 = por %p161, %p162
      %p164 = scmp.ne.s32.totalorder %s152, %s153
      %p165 = scmp.eq.s32.totalorder %s33, 1
      %p166 = por %p164, %p165
      %p168 = scmp.ne.s32.totalorder %s153, %s167
      %p169 = scmp.eq.s32.totalorder %s33, 0
      %p170 = por %p168, %p169
      %s171 = ssub.s32 %s27, %s34
      %p172 = scmp.eq.s32.totalorder %s171, 0
      %s174 = sadd.s32 %s173, 1
      %s175 = scalar_select %p172, %s173, %s174
      %p178 = pneg %p172
      %p179 = scmp.eq.s32.totalorder %s27, 1
      %p180 = por %p178, %p179
      %p181 = scmp.ne.s32.totalorder %s173, %s176
      %p182 = scmp.eq.s32.totalorder %s27, 0
      %p183 = por %p181, %p182
      %p184 = scmp.ne.s32.totalorder %s173, %s176
      %p185 = scmp.eq.s32.totalorder %s32, 1
      %p186 = por %p184, %p185
      %p187 = scmp.ne.s32.totalorder %s176, %s177
      %p188 = scmp.eq.s32.totalorder %s32, 0
      %p189 = por %p187, %p188
      %p190 = scmp.ne.s32.totalorder %s176, %s177
      %p191 = scmp.eq.s32.totalorder %s33, 1
      %p192 = por %p190, %p191
      %p194 = scmp.ne.s32.totalorder %s177, %s193
      %p195 = scmp.eq.s32.totalorder %s33, 0
      %p196 = por %p194, %p195
      %s197 = ssub.s32 %s27, %s34
      %p198 = scmp.eq.s32.totalorder %s197, 0
      %s200 = sadd.s32 %s199, 1
      %s201 = scalar_select %p198, %s199, %s200
      %p204 = pneg %p198
      %p205 = scmp.eq.s32.totalorder %s27, 1
      %p206 = por %p204, %p205
      %p207 = scmp.ne.s32.totalorder %s199, %s202
      %p208 = scmp.eq.s32.totalorder %s27, 0
      %p209 = por %p207, %p208
      %p210 = scmp.ne.s32.totalorder %s199, %s202
      %p211 = scmp.eq.s32.totalorder %s32, 1
      %p212 = por %p210, %p211
      %p213 = scmp.ne.s32.totalorder %s202, %s203
      %p214 = scmp.eq.s32.totalorder %s32, 0
      %p215 = por %p213, %p214
      %p216 = scmp.ne.s32.totalorder %s202, %s203
      %p217 = scmp.eq.s32.totalorder %s33, 1
      %p218 = por %p216, %p217
      %p220 = scmp.ne.s32.totalorder %s203, %s219
      %p221 = scmp.eq.s32.totalorder %s33, 0
      %p222 = por %p220, %p221
      %p223 = scmp.le.s32.totalorder 1, %s27
      %p224 = scmp.lt.s32.totalorder %s27, 3
      %p225 = pnand %p223, %p224
      %p226 = pneg %p225
      // Predicated region
      $region9: #{tpu_custom_call.1} parent=5 // pred_check
        _
      $region10: #{tpu_custom_call.1} parent=5 // pred_check_branch
        %228 = sbr.rel (%p225) target = $region12
      $region11: #{tpu_custom_call.1} parent=5 // pred_region
        %s229 = ssub.s32 %s27, 1
        // Predicated region
        $region13: #{tpu_custom_call.1} parent=11 // pred_check
          %p230 = pneg %p100
        $region14: #{tpu_custom_call.1} parent=11 // pred_check_branch
          %232 = sbr.rel (%p230) target = $region16
        $region15: #{tpu_custom_call.1} parent=11 // pred_region
          %s234 = ssub.s32 512, 512
          %235 = vsyncadd [#allocation6], %s234
          %s236 = sshll.u32 [#allocation7], 4
          %s237 = int_to_ptr.vmem [resolvable:$true] %s236
          %242 = dma.hbm_to_vmem [thread:$0]  %s2, 512, %s237, [#allocation6], 128, 128, 8
        $region16: #{tpu_custom_call.1} parent=11 // pred_fallthru
          _
        // Predicated region
        $region17: #{tpu_custom_call.1} parent=11 // pred_check
          %p243 = pneg %p121
        $region18: #{tpu_custom_call.1} parent=11 // pred_check_branch
          %245 = sbr.rel (%p243) target = $region20
        $region19: #{tpu_custom_call.1} parent=11 // pred_region
          _
        $region20: #{tpu_custom_call.1} parent=11 // pred_fallthru
          _
        // Predicated region
        $region21: #{tpu_custom_call.1} parent=11 // pred_check
          %p246 = pneg %p142
        $region22: #{tpu_custom_call.1} parent=11 // pred_check_branch
          %248 = sbr.rel (%p246) target = $region24
        $region23: #{tpu_custom_call.1} parent=11 // pred_region
          %s250 = ssub.s32 512, 512
          %251 = vsyncadd [#allocation9], %s250
          %s252 = sshll.u32 [#allocation8], 4
          %s253 = int_to_ptr.vmem [resolvable:$true] %s252
          %258 = dma.hbm_to_vmem [thread:$0]  %s4, 512, %s253, [#allocation9], 128, 128, 8
        $region24: #{tpu_custom_call.1} parent=11 // pred_fallthru
          _
        // Predicated region
        $region25: #{tpu_custom_call.1} parent=11 // pred_check
          %p259 = pneg %p163
        $region26: #{tpu_custom_call.1} parent=11 // pred_check_branch
          %261 = sbr.rel (%p259) target = $region28
        $region27: #{tpu_custom_call.1} parent=11 // pred_region
          _
        $region28: #{tpu_custom_call.1} parent=11 // pred_fallthru
          _
      $region12: #{tpu_custom_call.1} parent=5 // pred_fallthru
        _
      %p262 = scmp.lt.s32.totalorder %s27, 2
      // Predicated region
      $region29: #{tpu_custom_call.1} parent=5 // pred_check
        %p263 = pneg %p262
      $region30: #{tpu_custom_call.1} parent=5 // pred_check_branch
        %265 = sbr.rel (%p263) target = $region32
      $region31: #{tpu_custom_call.1} parent=5 // pred_region
        // Predicated region
        $region33: #{tpu_custom_call.1} parent=31 // pred_check
          %p266 = pneg %p47
        $region34: #{tpu_custom_call.1} parent=31 // pred_check_branch
          %268 = sbr.rel (%p266) target = $region36
        $region35: #{tpu_custom_call.1} parent=31 // pred_region
          %s269 = sand.u32 %s37, 1
          %s270 = scalar_lea.sflag [#allocation3], %s269
          %s271 = sand.u32 %s37, 1
          %s272 = smul.addr %s271, 8
          %s273 = scalar_lea.vmem [#allocation2], %s272
          %s275 = ssub.s32 128, 128
          %276 = vsyncadd %s270, %s275
          %s277 = smul.addr %s27, 128
          %s278 = scalar_lea.hbm %s0, %s277
          %s280 = sshll.u32 %s273, 4
          %s281 = int_to_ptr.vmem [resolvable:$true] %s280
          %283 = dma.hbm_to_vmem [thread:$0]  %s278, 128, %s281, %s270
        $region36: #{tpu_custom_call.1} parent=31 // pred_fallthru
          _
        // Predicated region
        $region37: #{tpu_custom_call.1} parent=31 // pred_check
          %p284 = pneg %p73
        $region38: #{tpu_custom_call.1} parent=31 // pred_check_branch
          %286 = sbr.rel (%p284) target = $region40
        $region39: #{tpu_custom_call.1} parent=31 // pred_region
          %s287 = sand.u32 %s27, 1
          %s288 = scalar_lea.sflag [#allocation6], %s287
          %s289 = sand.u32 %s63, 1
          %s290 = smul.addr %s289, 8
          %s291 = scalar_lea.vmem [#allocation5], %s290
          %s293 = ssub.s32 128, 128
          %294 = vsyncadd %s288, %s293
          %s295 = smul.addr %s27, 128
          %s296 = scalar_lea.hbm %s1, %s295
          %s298 = sshll.u32 %s291, 4
          %s299 = int_to_ptr.vmem [resolvable:$true] %s298
          %301 = dma.hbm_to_vmem [thread:$0]  %s296, 128, %s299, %s288
        $region40: #{tpu_custom_call.1} parent=31 // pred_fallthru
          _
      $region32: #{tpu_custom_call.1} parent=5 // pred_fallthru
        _
      %p302 = scmp.le.s32.totalorder 1, %s27
      %p303 = scmp.lt.s32.totalorder %s27, 3
      %p304 = pnand %p302, %p303
      %p305 = pneg %p304
      // Predicated region
      $region41: #{tpu_custom_call.1} parent=5 // pred_check
        _
      $region42: #{tpu_custom_call.1} parent=5 // pred_check_branch
        %307 = sbr.rel (%p304) target = $region44
      $region43: #{tpu_custom_call.1} parent=5 // pred_region
        %s308 = ssub.s32 %s27, 1
        %s309 = sand.u32 %s40, 1
        %s310 = scalar_lea.sflag [#allocation3], %s309
        %s311 = sand.u32 %s40, 1
        %s312 = smul.addr %s311, 8
        %s313 = scalar_lea.vmem [#allocation2], %s312
        // Predicated region
        $region45: #{tpu_custom_call.1} parent=43 // pred_check
          %p314 = pneg %p53
        $region46: #{tpu_custom_call.1} parent=43 // pred_check_branch
          %316 = sbr.rel (%p314) target = $region48
        $region47: #{tpu_custom_call.1} parent=43 // pred_region
          %317 = dma.done %s310, 128
        $region48: #{tpu_custom_call.1} parent=43 // pred_fallthru
          _
        %s318 = sand.u32 %s32, 1
        %s319 = scalar_lea.sflag [#allocation6], %s318
        %s320 = sand.u32 %s66, 1
        %s321 = smul.addr %s320, 8
        %s322 = scalar_lea.vmem [#allocation5], %s321
        // Predicated region
        $region49: #{tpu_custom_call.1} parent=43 // pred_check
          %p323 = pneg %p79
        $region50: #{tpu_custom_call.1} parent=43 // pred_check_branch
          %325 = sbr.rel (%p323) target = $region52
        $region51: #{tpu_custom_call.1} parent=43 // pred_region
          %326 = dma.done %s319, 128
        $region52: #{tpu_custom_call.1} parent=43 // pred_fallthru
          _
        // Predicated region
        $region53: #{tpu_custom_call.1} parent=43 // pred_check
          %p327 = pneg %p100
        $region54: #{tpu_custom_call.1} parent=43 // pred_check_branch
          %329 = sbr.rel (%p327) target = $region56
        $region55: #{tpu_custom_call.1} parent=43 // pred_region
          %330 = dma.done [#allocation6], 512
        $region56: #{tpu_custom_call.1} parent=43 // pred_fallthru
          _
        // Predicated region
        $region57: #{tpu_custom_call.1} parent=43 // pred_check
          %p331 = pneg %p142
        $region58: #{tpu_custom_call.1} parent=43 // pred_check_branch
          %333 = sbr.rel (%p331) target = $region60
        $region59: #{tpu_custom_call.1} parent=43 // pred_region
          %334 = dma.done [#allocation9], 512
        $region60: #{tpu_custom_call.1} parent=43 // pred_fallthru
          _
        %s335 = sand.u32 %s40, 1
        %s336 = scalar_lea.sflag [#allocation3], %s335
        %s337 = sand.u32 %s40, 1
        %s338 = smul.addr %s337, 8
        %s339 = scalar_lea.vmem [#allocation2], %s338
        %p340 = pneg %p53
        %p341 = pneg %p50
        %s342 = sand.u32 %s32, 1
        %s343 = scalar_lea.sflag [#allocation6], %s342
        %s344 = sand.u32 %s66, 1
        %s345 = smul.addr %s344, 8
        %s346 = scalar_lea.vmem [#allocation5], %s345
        %p347 = pneg %p79
        %p348 = pneg %p76
        %p349 = pneg %p100
        %p350 = pneg %p97
        %p351 = pneg %p121
        %p352 = pneg %p118
        %p353 = pneg %p142
        %p354 = pneg %p139
        %p355 = pneg %p163
        %p356 = pneg %p160
        %p357 = pneg %p189
        %p358 = pneg %p186
        %s359 = sand.u32 %s176, 1
        %s360 = scalar_lea.sflag [#allocation4], %s359
        %s361 = sand.u32 %s176, 1
        %s362 = smul.addr %s361, 8
        %s363 = scalar_lea.vmem [#allocation10], %s362
        %p364 = pneg %p215
        %p365 = pneg %p212
        %s366 = sand.u32 %s202, 1
        %s367 = scalar_lea.sflag [#allocation12], %s366
        %s368 = sand.u32 %s202, 1
        %s369 = smul.addr %s368, 32
        %s370 = scalar_lea.vmem [#allocation11], %s369
        %v371 = vld [vmem:[%s313] sm:$0xff]
        %v372 = vld [vmem:[#allocation7] sm:$0xff]
        %v373 = vld [vmem:[#allocation7 + $0x8] sm:$0xff]
        %v374 = vld [vmem:[#allocation7 + $0x10] sm:$0xff]
        %v375 = vld [vmem:[#allocation7 + $0x18] sm:$0xff]
        %v376 = vld [vmem:[%s3] sm:$0x1]
        %v378 = vlaneseq
        %v379 = vshrl.u32 %v378, 7
        %v380 = vsub.s32 0, %v379
        %v381 = vrot.slane %v376, %v380
        %vm383 = vcmask 261120
        %v385 = vsel %vm383, %v371, 0
        %387 = vmatprep.subr.mxu0 0.0
        %388 = vmatpush1.msra.mxu0 0.0
        %389 = vmatprep.subr.mxu0 0.0
        %390 = vmatpush1.msra.mxu0 0.0
        %391 = vmatprep.subr.mxu0 0.0
        %392 = vmatpush1.msra.mxu0 0.0
        %393 = vmatprep.subr.mxu0 0.0
        %394 = vmatpush1.msra.mxu0 0.0
        %395 = vmatprep.subr.mxu0 0.0
        %396 = vmatpush1.msra.mxu0 0.0
        %397 = vmatprep.subr.mxu0 0.0
        %398 = vmatpush1.msra.mxu0 0.0
        %399 = vmatprep.subr.mxu0 0.0
        %400 = vmatpush1.msra.mxu0 0.0
        %401 = vmatprep.subr.mxu0 0.0
        %402 = vmatpush1.msra.mxu0 0.0
        %403 = vmatprep.subr.mxu0 0.0
        %404 = vmatpush1.msra.mxu0 0.0
        %405 = vmatprep.subr.mxu0 0.0
        %406 = vmatpush1.msra.mxu0 0.0
        %407 = vmatprep.subr.mxu0 0.0
        %408 = vmatpush1.msra.mxu0 0.0
        %409 = vmatprep.subr.mxu0 0.0
        %410 = vmatpush1.msra.mxu0 0.0
        %411 = vmatprep.subr.mxu0 0.0
        %412 = vmatpush1.msra.mxu0 %v375
        %413 = vmatprep.subr.mxu0 0.0
        %414 = vmatpush1.msra.mxu0 %v374
        %415 = vmatprep.subr.mxu0 0.0
        %416 = vmatpush1.msra.mxu0 %v373
        %417 = vmatprep.subr.mxu0 0.0
        %418 = vmatpush1.msra.mxu0 %v372
        %419 = vmatprep.subr.mxu0 0.0
        %420 = vmatpush2.msra.mxu0 0.0
        %421 = vmatprep.subr.mxu0 0.0
        %422 = vmatpush2.msra.mxu0 0.0
        %423 = vmatprep.subr.mxu0 0.0
        %424 = vmatpush2.msra.mxu0 0.0
        %425 = vmatprep.subr.mxu0 0.0
        %426 = vmatpush2.msra.mxu0 0.0
        %427 = vmatprep.subr.mxu0 0.0
        %428 = vmatpush2.msra.mxu0 0.0
        %429 = vmatprep.subr.mxu0 0.0
        %430 = vmatpush2.msra.mxu0 0.0
        %431 = vmatprep.subr.mxu0 0.0
        %432 = vmatpush2.msra.mxu0 0.0
        %433 = vmatprep.subr.mxu0 0.0
        %434 = vmatpush2.msra.mxu0 0.0
        %435 = vmatprep.subr.mxu0 0.0
        %436 = vmatpush2.msra.mxu0 0.0
        %437 = vmatprep.subr.mxu0 0.0
        %438 = vmatpush2.msra.mxu0 0.0
        %439 = vmatprep.subr.mxu0 0.0
        %440 = vmatpush2.msra.mxu0 0.0
        %441 = vmatprep.subr.mxu0 0.0
        %442 = vmatpush2.msra.mxu0 0.0
        %443 = vmatprep.subr.mxu0 0.0
        %444 = vmatpush2.msra.mxu0 0.0
        %445 = vmatprep.subr.mxu0 0.0
        %446 = vmatpush2.msra.mxu0 0.0
        %447 = vmatprep.subr.mxu0 0.0
        %448 = vmatpush2.msra.mxu0 0.0
        %449 = vmatprep.subr.mxu0 0.0
        %450 = vmatpush2.msra.mxu0 0.0
        %451 = vmatprep.mubr.f32.mxu0 0.0
        %452 = vmatmul.mubr.f32.gmra.mxu0 %v385
        %v453 = vpop.f32.mrf.mxu0
        %v454 = vadd.f32 %v381, %v453
        %v455 = vpop.f32.mrf.mxu0
        %456 = vdwg.mxu0
        %v457 = vld [vmem:[%s322] sm:$0xff]
        %vm458 = vcmp.ne.f32.partialorder %v457, 0.0
        %460 = vrot.lane.b32.xlu0 %v454, 96
        %v461 = vpop.permute.xlu0 %460
        %vm462 = vcmask 64512
        %v463 = vsel %vm462, %v454, 0
        %v465 = vsel %vm462, %v461, 0
        %467 = vmatprep.subr.mxu0 0.0
        %468 = vmatpush1.xpose.msra.mxu0 0.0
        %469 = vmatprep.subr.mxu0 0.0
        %470 = vmatpush1.xpose.msra.mxu0 0.0
        %471 = vmatprep.subr.mxu0 0.0
        %472 = vmatpush1.xpose.msra.mxu0 0.0
        %473 = vmatprep.subr.mxu0 0.0
        %474 = vmatpush1.xpose.msra.mxu0 0.0
        %475 = vmatprep.subr.mxu0 0.0
        %476 = vmatpush1.xpose.msra.mxu0 0.0
        %477 = vmatprep.subr.mxu0 0.0
        %478 = vmatpush1.xpose.msra.mxu0 0.0
        %479 = vmatprep.subr.mxu0 0.0
        %480 = vmatpush1.xpose.msra.mxu0 0.0
        %481 = vmatprep.subr.mxu0 0.0
        %482 = vmatpush1.xpose.msra.mxu0 0.0
        %483 = vmatprep.subr.mxu0 0.0
        %484 = vmatpush1.xpose.msra.mxu0 0.0
        %485 = vmatprep.subr.mxu0 0.0
        %486 = vmatpush1.xpose.msra.mxu0 0.0
        %487 = vmatprep.subr.mxu0 0.0
        %488 = vmatpush1.xpose.msra.mxu0 0.0
        %489 = vmatprep.subr.mxu0 0.0
        %490 = vmatpush1.xpose.msra.mxu0 0.0
        %491 = vmatprep.subr.mxu0 0.0
        %492 = vmatpush1.xpose.msra.mxu0 0.0
        %493 = vmatprep.subr.mxu0 0.0
        %494 = vmatpush1.xpose.msra.mxu0 0.0
        %495 = vmatprep.subr.mxu0 0.0
        %496 = vmatpush1.xpose.msra.mxu0 0.0
        %497 = vmatprep.subr.mxu0 0.0
        %498 = vmatpush1.xpose.msra.mxu0 %v465
        %499 = vmatprep.subr.mxu0 0.0
        %500 = vmatpush2.xpose.msra.mxu0 0.0
        %501 = vmatprep.subr.mxu0 0.0
        %502 = vmatpush2.xpose.msra.mxu0 0.0
        %503 = vmatprep.subr.mxu0 0.0
        %504 = vmatpush2.xpose.msra.mxu0 0.0
        %505 = vmatprep.subr.mxu0 0.0
        %506 = vmatpush2.xpose.msra.mxu0 0.0
        %507 = vmatprep.subr.mxu0 0.0
        %508 = vmatpush2.xpose.msra.mxu0 0.0
        %509 = vmatprep.subr.mxu0 0.0
        %510 = vmatpush2.xpose.msra.mxu0 0.0
        %511 = vmatprep.subr.mxu0 0.0
        %512 = vmatpush2.xpose.msra.mxu0 0.0
        %513 = vmatprep.subr.mxu0 0.0
        %514 = vmatpush2.xpose.msra.mxu0 0.0
        %515 = vmatprep.subr.mxu0 0.0
        %516 = vmatpush2.xpose.msra.mxu0 0.0
        %517 = vmatprep.subr.mxu0 0.0
        %518 = vmatpush2.xpose.msra.mxu0 0.0
        %519 = vmatprep.subr.mxu0 0.0
        %520 = vmatpush2.xpose.msra.mxu0 0.0
        %521 = vmatprep.subr.mxu0 0.0
        %522 = vmatpush2.xpose.msra.mxu0 0.0
        %523 = vmatprep.subr.mxu0 0.0
        %524 = vmatpush2.xpose.msra.mxu0 0.0
        %525 = vmatprep.subr.mxu0 0.0
        %526 = vmatpush2.xpose.msra.mxu0 0.0
        %527 = vmatprep.subr.mxu0 0.0
        %528 = vmatpush2.xpose.msra.mxu0 0.0
        %529 = vmatprep.subr.mxu0 0.0
        %530 = vmatpush2.xpose.msra.mxu0 0.0
        %531 = vmatprep.mubr.f32.mxu0 0.0
        %532 = vmatmul.mubr.f32.gmra.mxu0 %v463
        %v533 = vpop.f32.mrf.mxu0
        %v534 = vadd.f32 0.0, %v533
        %v535 = vpop.f32.mrf.mxu0
        %536 = vdwg.mxu0
        %v537 = vmul.f32 %v534, 0.17677669
        %v538 = vsel %vm458, -1e+18, %v537
        %v539 = vsel %vm462, %v538, -inf
        %540 = vmax.xlane.f32.xlu0 %v539
        %v541 = vpop.xlane.xlu0 %540
        %v542 = vsub.f32 %v538, %v541
        %v543 = vmul.f32 %v542, 1.442695
        %v544 = vpow.pop %v543
        %v545 = vsel %vm462, %v544, 0.0
        %546 = vadd.xlane.f32.xlu0 %v545
        %v547 = vpop.xlane.xlu0 %546
        %v548 = vrcp.pop %v547
        %v549 = vmul.f32 %v544, %v548
        %550 = vst.msk [vmem:[%s370] sm:$0xff] %vm462, %v549
        %551 = vrot.lane.b32.xlu0 %v454, 64
        %v552 = vpop.permute.xlu0 %551
        %v555 = vsel %vm462, %v549, 0
        %557 = vmatprep.subr.mxu0 0.0
        %558 = vmatpush1.msra.mxu0 0.0
        %559 = vmatprep.subr.mxu0 0.0
        %560 = vmatpush1.msra.mxu0 0.0
        %561 = vmatprep.subr.mxu0 0.0
        %562 = vmatpush1.msra.mxu0 0.0
        %563 = vmatprep.subr.mxu0 0.0
        %564 = vmatpush1.msra.mxu0 0.0
        %565 = vmatprep.subr.mxu0 0.0
        %566 = vmatpush1.msra.mxu0 0.0
        %567 = vmatprep.subr.mxu0 0.0
        %568 = vmatpush1.msra.mxu0 0.0
        %569 = vmatprep.subr.mxu0 0.0
        %570 = vmatpush1.msra.mxu0 0.0
        %571 = vmatprep.subr.mxu0 0.0
        %572 = vmatpush1.msra.mxu0 0.0
        %573 = vmatprep.subr.mxu0 0.0
        %574 = vmatpush1.msra.mxu0 0.0
        %575 = vmatprep.subr.mxu0 0.0
        %576 = vmatpush1.msra.mxu0 0.0
        %577 = vmatprep.subr.mxu0 0.0
        %578 = vmatpush1.msra.mxu0 0.0
        %579 = vmatprep.subr.mxu0 0.0
        %580 = vmatpush1.msra.mxu0 0.0
        %581 = vmatprep.subr.mxu0 0.0
        %582 = vmatpush1.msra.mxu0 0.0
        %583 = vmatprep.subr.mxu0 0.0
        %584 = vmatpush1.msra.mxu0 0.0
        %585 = vmatprep.subr.mxu0 0.0
        %586 = vmatpush1.msra.mxu0 0.0
        %587 = vmatprep.subr.mxu0 0.0
        %588 = vmatpush1.msra.mxu0 %v552
        %589 = vmatprep.subr.mxu0 0.0
        %590 = vmatpush2.msra.mxu0 0.0
        %591 = vmatprep.subr.mxu0 0.0
        %592 = vmatpush2.msra.mxu0 0.0
        %593 = vmatprep.subr.mxu0 0.0
        %594 = vmatpush2.msra.mxu0 0.0
        %595 = vmatprep.subr.mxu0 0.0
        %596 = vmatpush2.msra.mxu0 0.0
        %597 = vmatprep.subr.mxu0 0.0
        %598 = vmatpush2.msra.mxu0 0.0
        %599 = vmatprep.subr.mxu0 0.0
        %600 = vmatpush2.msra.mxu0 0.0
        %601 = vmatprep.subr.mxu0 0.0
        %602 = vmatpush2.msra.mxu0 0.0
        %603 = vmatprep.subr.mxu0 0.0
        %604 = vmatpush2.msra.mxu0 0.0
        %605 = vmatprep.subr.mxu0 0.0
        %606 = vmatpush2.msra.mxu0 0.0
        %607 = vmatprep.subr.mxu0 0.0
        %608 = vmatpush2.msra.mxu0 0.0
        %609 = vmatprep.subr.mxu0 0.0
        %610 = vmatpush2.msra.mxu0 0.0
        %611 = vmatprep.subr.mxu0 0.0
        %612 = vmatpush2.msra.mxu0 0.0
        %613 = vmatprep.subr.mxu0 0.0
        %614 = vmatpush2.msra.mxu0 0.0
        %615 = vmatprep.subr.mxu0 0.0
        %616 = vmatpush2.msra.mxu0 0.0
        %617 = vmatprep.subr.mxu0 0.0
        %618 = vmatpush2.msra.mxu0 0.0
        %619 = vmatprep.subr.mxu0 0.0
        %620 = vmatpush2.msra.mxu0 0.0
        %621 = vmatprep.mubr.f32.mxu0 0.0
        %622 = vmatmul.mubr.f32.gmra.mxu0 %v555
        %v623 = vpop.f32.mrf.mxu0
        %v624 = vadd.f32 0.0, %v623
        %v625 = vpop.f32.mrf.mxu0
        %626 = vdwg.mxu0
        %v627 = vld [vmem:[#allocation8] sm:$0xff]
        %628 = vrot.lane.b32.xlu0 %v454, 120
        %v629 = vpop.permute.xlu0 %628
        %630 = vrot.lane.b32.xlu0 %v454, 88
        %v631 = vpop.permute.xlu0 %630
        %v632 = vsel %vm462, %v629, 0
        %v634 = vsel %vm462, %v631, 0
        %636 = vmatprep.subr.mxu0 0.0
        %637 = vmatpush1.xpose.msra.mxu0 0.0
        %638 = vmatprep.subr.mxu0 0.0
        %639 = vmatpush1.xpose.msra.mxu0 0.0
        %640 = vmatprep.subr.mxu0 0.0
        %641 = vmatpush1.xpose.msra.mxu0 0.0
        %642 = vmatprep.subr.mxu0 0.0
        %643 = vmatpush1.xpose.msra.mxu0 0.0
        %644 = vmatprep.subr.mxu0 0.0
        %645 = vmatpush1.xpose.msra.mxu0 0.0
        %646 = vmatprep.subr.mxu0 0.0
        %647 = vmatpush1.xpose.msra.mxu0 0.0
        %648 = vmatprep.subr.mxu0 0.0
        %649 = vmatpush1.xpose.msra.mxu0 0.0
        %650 = vmatprep.subr.mxu0 0.0
        %651 = vmatpush1.xpose.msra.mxu0 0.0
        %652 = vmatprep.subr.mxu0 0.0
        %653 = vmatpush1.xpose.msra.mxu0 0.0
        %654 = vmatprep.subr.mxu0 0.0
        %655 = vmatpush1.xpose.msra.mxu0 0.0
        %656 = vmatprep.subr.mxu0 0.0
        %657 = vmatpush1.xpose.msra.mxu0 0.0
        %658 = vmatprep.subr.mxu0 0.0
        %659 = vmatpush1.xpose.msra.mxu0 0.0
        %660 = vmatprep.subr.mxu0 0.0
        %661 = vmatpush1.xpose.msra.mxu0 0.0
        %662 = vmatprep.subr.mxu0 0.0
        %663 = vmatpush1.xpose.msra.mxu0 0.0
        %664 = vmatprep.subr.mxu0 0.0
        %665 = vmatpush1.xpose.msra.mxu0 0.0
        %666 = vmatprep.subr.mxu0 0.0
        %667 = vmatpush1.xpose.msra.mxu0 %v634
        %668 = vmatprep.subr.mxu0 0.0
        %669 = vmatpush2.xpose.msra.mxu0 0.0
        %670 = vmatprep.subr.mxu0 0.0
        %671 = vmatpush2.xpose.msra.mxu0 0.0
        %672 = vmatprep.subr.mxu0 0.0
        %673 = vmatpush2.xpose.msra.mxu0 0.0
        %674 = vmatprep.subr.mxu0 0.0
        %675 = vmatpush2.xpose.msra.mxu0 0.0
        %676 = vmatprep.subr.mxu0 0.0
        %677 = vmatpush2.xpose.msra.mxu0 0.0
        %678 = vmatprep.subr.mxu0 0.0
        %679 = vmatpush2.xpose.msra.mxu0 0.0
        %680 = vmatprep.subr.mxu0 0.0
        %681 = vmatpush2.xpose.msra.mxu0 0.0
        %682 = vmatprep.subr.mxu0 0.0
        %683 = vmatpush2.xpose.msra.mxu0 0.0
        %684 = vmatprep.subr.mxu0 0.0
        %685 = vmatpush2.xpose.msra.mxu0 0.0
        %686 = vmatprep.subr.mxu0 0.0
        %687 = vmatpush2.xpose.msra.mxu0 0.0
        %688 = vmatprep.subr.mxu0 0.0
        %689 = vmatpush2.xpose.msra.mxu0 0.0
        %690 = vmatprep.subr.mxu0 0.0
        %691 = vmatpush2.xpose.msra.mxu0 0.0
        %692 = vmatprep.subr.mxu0 0.0
        %693 = vmatpush2.xpose.msra.mxu0 0.0
        %694 = vmatprep.subr.mxu0 0.0
        %695 = vmatpush2.xpose.msra.mxu0 0.0
        %696 = vmatprep.subr.mxu0 0.0
        %697 = vmatpush2.xpose.msra.mxu0 0.0
        %698 = vmatprep.subr.mxu0 0.0
        %699 = vmatpush2.xpose.msra.mxu0 0.0
        %700 = vmatprep.mubr.f32.mxu0 0.0
        %701 = vmatmul.mubr.f32.gmra.mxu0 %v632
        %v702 = vpop.f32.mrf.mxu0
        %v703 = vadd.f32 0.0, %v702
        %v704 = vpop.f32.mrf.mxu0
        %705 = vdwg.mxu0
        %v706 = vmul.f32 %v703, 0.17677669
        %v707 = vsel %vm458, -1e+18, %v706
        %v708 = vsel %vm462, %v707, -inf
        %709 = vmax.xlane.f32.xlu0 %v708
        %v710 = vpop.xlane.xlu0 %709
        %v711 = vsub.f32 %v707, %v710
        %v712 = vmul.f32 %v711, 1.442695
        %v713 = vpow.pop %v712
        %v714 = vsel %vm462, %v713, 0.0
        %715 = vadd.xlane.f32.xlu0 %v714
        %v716 = vpop.xlane.xlu0 %715
        %v717 = vrcp.pop %v716
        %v718 = vmul.f32 %v713, %v717
        %s719 = scalar_lea.vmem %s370, 8 [#allocation11]
        %720 = vst.msk [vmem:[%s719] sm:$0xff] %vm462, %v718
        %721 = vrot.lane.b32.xlu0 %v454, 56
        %v722 = vpop.permute.xlu0 %721
        %v725 = vsel %vm462, %v718, 0
        %727 = vmatprep.subr.mxu0 0.0
        %728 = vmatpush1.msra.mxu0 0.0
        %729 = vmatprep.subr.mxu0 0.0
        %730 = vmatpush1.msra.mxu0 0.0
        %731 = vmatprep.subr.mxu0 0.0
        %732 = vmatpush1.msra.mxu0 0.0
        %733 = vmatprep.subr.mxu0 0.0
        %734 = vmatpush1.msra.mxu0 0.0
        %735 = vmatprep.subr.mxu0 0.0
        %736 = vmatpush1.msra.mxu0 0.0
        %737 = vmatprep.subr.mxu0 0.0
        %738 = vmatpush1.msra.mxu0 0.0
        %739 = vmatprep.subr.mxu0 0.0
        %740 = vmatpush1.msra.mxu0 0.0
        %741 = vmatprep.subr.mxu0 0.0
        %742 = vmatpush1.msra.mxu0 0.0
        %743 = vmatprep.subr.mxu0 0.0
        %744 = vmatpush1.msra.mxu0 0.0
        %745 = vmatprep.subr.mxu0 0.0
        %746 = vmatpush1.msra.mxu0 0.0
        %747 = vmatprep.subr.mxu0 0.0
        %748 = vmatpush1.msra.mxu0 0.0
        %749 = vmatprep.subr.mxu0 0.0
        %750 = vmatpush1.msra.mxu0 0.0
        %751 = vmatprep.subr.mxu0 0.0
        %752 = vmatpush1.msra.mxu0 0.0
        %753 = vmatprep.subr.mxu0 0.0
        %754 = vmatpush1.msra.mxu0 0.0
        %755 = vmatprep.subr.mxu0 0.0
        %756 = vmatpush1.msra.mxu0 0.0
        %757 = vmatprep.subr.mxu0 0.0
        %758 = vmatpush1.msra.mxu0 %v722
        %759 = vmatprep.subr.mxu0 0.0
        %760 = vmatpush2.msra.mxu0 0.0
        %761 = vmatprep.subr.mxu0 0.0
        %762 = vmatpush2.msra.mxu0 0.0
        %763 = vmatprep.subr.mxu0 0.0
        %764 = vmatpush2.msra.mxu0 0.0
        %765 = vmatprep.subr.mxu0 0.0
        %766 = vmatpush2.msra.mxu0 0.0
        %767 = vmatprep.subr.mxu0 0.0
        %768 = vmatpush2.msra.mxu0 0.0
        %769 = vmatprep.subr.mxu0 0.0
        %770 = vmatpush2.msra.mxu0 0.0
        %771 = vmatprep.subr.mxu0 0.0
        %772 = vmatpush2.msra.mxu0 0.0
        %773 = vmatprep.subr.mxu0 0.0
        %774 = vmatpush2.msra.mxu0 0.0
        %775 = vmatprep.subr.mxu0 0.0
        %776 = vmatpush2.msra.mxu0 0.0
        %777 = vmatprep.subr.mxu0 0.0
        %778 = vmatpush2.msra.mxu0 0.0
        %779 = vmatprep.subr.mxu0 0.0
        %780 = vmatpush2.msra.mxu0 0.0
        %781 = vmatprep.subr.mxu0 0.0
        %782 = vmatpush2.msra.mxu0 0.0
        %783 = vmatprep.subr.mxu0 0.0
        %784 = vmatpush2.msra.mxu0 0.0
        %785 = vmatprep.subr.mxu0 0.0
        %786 = vmatpush2.msra.mxu0 0.0
        %787 = vmatprep.subr.mxu0 0.0
        %788 = vmatpush2.msra.mxu0 0.0
        %789 = vmatprep.subr.mxu0 0.0
        %790 = vmatpush2.msra.mxu0 0.0
        %791 = vmatprep.mubr.f32.mxu0 0.0
        %792 = vmatmul.mubr.f32.gmra.mxu0 %v725
        %v793 = vpop.f32.mrf.mxu0
        %v794 = vadd.f32 0.0, %v793
        %v795 = vpop.f32.mrf.mxu0
        %796 = vdwg.mxu0
        %v797 = vld [vmem:[#allocation8 + $0x8] sm:$0xff]
        %v799 = vsel %vm462, %v794, 0
        %801 = vmatprep.subr.mxu0 0.0
        %802 = vmatpush1.msra.mxu0 0.0
        %803 = vmatprep.subr.mxu0 0.0
        %804 = vmatpush1.msra.mxu0 0.0
        %805 = vmatprep.subr.mxu0 0.0
        %806 = vmatpush1.msra.mxu0 0.0
        %807 = vmatprep.subr.mxu0 0.0
        %808 = vmatpush1.msra.mxu0 0.0
        %809 = vmatprep.subr.mxu0 0.0
        %810 = vmatpush1.msra.mxu0 0.0
        %811 = vmatprep.subr.mxu0 0.0
        %812 = vmatpush1.msra.mxu0 0.0
        %813 = vmatprep.subr.mxu0 0.0
        %814 = vmatpush1.msra.mxu0 0.0
        %815 = vmatprep.subr.mxu0 0.0
        %816 = vmatpush1.msra.mxu0 0.0
        %817 = vmatprep.subr.mxu0 0.0
        %818 = vmatpush1.msra.mxu0 0.0
        %819 = vmatprep.subr.mxu0 0.0
        %820 = vmatpush1.msra.mxu0 0.0
        %821 = vmatprep.subr.mxu0 0.0
        %822 = vmatpush1.msra.mxu0 0.0
        %823 = vmatprep.subr.mxu0 0.0
        %824 = vmatpush1.msra.mxu0 0.0
        %825 = vmatprep.subr.mxu0 0.0
        %826 = vmatpush1.msra.mxu0 0.0
        %827 = vmatprep.subr.mxu0 0.0
        %828 = vmatpush1.msra.mxu0 0.0
        %829 = vmatprep.subr.mxu0 0.0
        %830 = vmatpush1.msra.mxu0 0.0
        %831 = vmatprep.subr.mxu0 0.0
        %832 = vmatpush1.msra.mxu0 %v797
        %833 = vmatprep.subr.mxu0 0.0
        %834 = vmatpush2.msra.mxu0 0.0
        %835 = vmatprep.subr.mxu0 0.0
        %836 = vmatpush2.msra.mxu0 0.0
        %837 = vmatprep.subr.mxu0 0.0
        %838 = vmatpush2.msra.mxu0 0.0
        %839 = vmatprep.subr.mxu0 0.0
        %840 = vmatpush2.msra.mxu0 0.0
        %841 = vmatprep.subr.mxu0 0.0
        %842 = vmatpush2.msra.mxu0 0.0
        %843 = vmatprep.subr.mxu0 0.0
        %844 = vmatpush2.msra.mxu0 0.0
        %845 = vmatprep.subr.mxu0 0.0
        %846 = vmatpush2.msra.mxu0 0.0
        %847 = vmatprep.subr.mxu0 0.0
        %848 = vmatpush2.msra.mxu0 0.0
        %849 = vmatprep.subr.mxu0 0.0
        %850 = vmatpush2.msra.mxu0 0.0
        %851 = vmatprep.subr.mxu0 0.0
        %852 = vmatpush2.msra.mxu0 0.0
        %853 = vmatprep.subr.mxu0 0.0
        %854 = vmatpush2.msra.mxu0 0.0
        %855 = vmatprep.subr.mxu0 0.0
        %856 = vmatpush2.msra.mxu0 0.0
        %857 = vmatprep.subr.mxu0 0.0
        %858 = vmatpush2.msra.mxu0 0.0
        %859 = vmatprep.subr.mxu0 0.0
        %860 = vmatpush2.msra.mxu0 0.0
        %861 = vmatprep.subr.mxu0 0.0
        %862 = vmatpush2.msra.mxu0 0.0
        %863 = vmatprep.subr.mxu0 0.0
        %864 = vmatpush2.msra.mxu0 0.0
        %865 = vmatprep.mubr.f32.mxu0 0.0
        %866 = vmatmul.mubr.f32.gmra.mxu0 %v799
        %v867 = vpop.f32.mrf.mxu0
        %v868 = vadd.f32 0.0, %v867
        %v869 = vpop.f32.mrf.mxu0
        %870 = vdwg.mxu0
        %v872 = vsel %vm462, %v624, 0
        %874 = vmatprep.subr.mxu0 0.0
        %875 = vmatpush1.msra.mxu0 0.0
        %876 = vmatprep.subr.mxu0 0.0
        %877 = vmatpush1.msra.mxu0 0.0
        %878 = vmatprep.subr.mxu0 0.0
        %879 = vmatpush1.msra.mxu0 0.0
        %880 = vmatprep.subr.mxu0 0.0
        %881 = vmatpush1.msra.mxu0 0.0
        %882 = vmatprep.subr.mxu0 0.0
        %883 = vmatpush1.msra.mxu0 0.0
        %884 = vmatprep.subr.mxu0 0.0
        %885 = vmatpush1.msra.mxu0 0.0
        %886 = vmatprep.subr.mxu0 0.0
        %887 = vmatpush1.msra.mxu0 0.0
        %888 = vmatprep.subr.mxu0 0.0
        %889 = vmatpush1.msra.mxu0 0.0
        %890 = vmatprep.subr.mxu0 0.0
        %891 = vmatpush1.msra.mxu0 0.0
        %892 = vmatprep.subr.mxu0 0.0
        %893 = vmatpush1.msra.mxu0 0.0
        %894 = vmatprep.subr.mxu0 0.0
        %895 = vmatpush1.msra.mxu0 0.0
        %896 = vmatprep.subr.mxu0 0.0
        %897 = vmatpush1.msra.mxu0 0.0
        %898 = vmatprep.subr.mxu0 0.0
        %899 = vmatpush1.msra.mxu0 0.0
        %900 = vmatprep.subr.mxu0 0.0
        %901 = vmatpush1.msra.mxu0 0.0
        %902 = vmatprep.subr.mxu0 0.0
        %903 = vmatpush1.msra.mxu0 0.0
        %904 = vmatprep.subr.mxu0 0.0
        %905 = vmatpush1.msra.mxu0 %v627
        %906 = vmatprep.subr.mxu0 0.0
        %907 = vmatpush2.msra.mxu0 0.0
        %908 = vmatprep.subr.mxu0 0.0
        %909 = vmatpush2.msra.mxu0 0.0
        %910 = vmatprep.subr.mxu0 0.0
        %911 = vmatpush2.msra.mxu0 0.0
        %912 = vmatprep.subr.mxu0 0.0
        %913 = vmatpush2.msra.mxu0 0.0
        %914 = vmatprep.subr.mxu0 0.0
        %915 = vmatpush2.msra.mxu0 0.0
        %916 = vmatprep.subr.mxu0 0.0
        %917 = vmatpush2.msra.mxu0 0.0
        %918 = vmatprep.subr.mxu0 0.0
        %919 = vmatpush2.msra.mxu0 0.0
        %920 = vmatprep.subr.mxu0 0.0
        %921 = vmatpush2.msra.mxu0 0.0
        %922 = vmatprep.subr.mxu0 0.0
        %923 = vmatpush2.msra.mxu0 0.0
        %924 = vmatprep.subr.mxu0 0.0
        %925 = vmatpush2.msra.mxu0 0.0
        %926 = vmatprep.subr.mxu0 0.0
        %927 = vmatpush2.msra.mxu0 0.0
        %928 = vmatprep.subr.mxu0 0.0
        %929 = vmatpush2.msra.mxu0 0.0
        %930 = vmatprep.subr.mxu0 0.0
        %931 = vmatpush2.msra.mxu0 0.0
        %932 = vmatprep.subr.mxu0 0.0
        %933 = vmatpush2.msra.mxu0 0.0
        %934 = vmatprep.subr.mxu0 0.0
        %935 = vmatpush2.msra.mxu0 0.0
        %936 = vmatprep.subr.mxu0 0.0
        %937 = vmatpush2.msra.mxu0 0.0
        %938 = vmatprep.mubr.f32.mxu0 0.0
        %939 = vmatmul.mubr.f32.gmra.mxu0 %v872
        %v940 = vpop.f32.mrf.mxu0
        %v941 = vadd.f32 %v868, %v940
        %v942 = vpop.f32.mrf.mxu0
        %943 = vdwg.mxu0
        %944 = vrot.lane.b32.xlu0 %v454, 112
        %v945 = vpop.permute.xlu0 %944
        %946 = vrot.lane.b32.xlu0 %v454, 80
        %v947 = vpop.permute.xlu0 %946
        %v948 = vsel %vm462, %v945, 0
        %v950 = vsel %vm462, %v947, 0
        %952 = vmatprep.subr.mxu0 0.0
        %953 = vmatpush1.xpose.msra.mxu0 0.0
        %954 = vmatprep.subr.mxu0 0.0
        %955 = vmatpush1.xpose.msra.mxu0 0.0
        %956 = vmatprep.subr.mxu0 0.0
        %957 = vmatpush1.xpose.msra.mxu0 0.0
        %958 = vmatprep.subr.mxu0 0.0
        %959 = vmatpush1.xpose.msra.mxu0 0.0
        %960 = vmatprep.subr.mxu0 0.0
        %961 = vmatpush1.xpose.msra.mxu0 0.0
        %962 = vmatprep.subr.mxu0 0.0
        %963 = vmatpush1.xpose.msra.mxu0 0.0
        %964 = vmatprep.subr.mxu0 0.0
        %965 = vmatpush1.xpose.msra.mxu0 0.0
        %966 = vmatprep.subr.mxu0 0.0
        %967 = vmatpush1.xpose.msra.mxu0 0.0
        %968 = vmatprep.subr.mxu0 0.0
        %969 = vmatpush1.xpose.msra.mxu0 0.0
        %970 = vmatprep.subr.mxu0 0.0
        %971 = vmatpush1.xpose.msra.mxu0 0.0
        %972 = vmatprep.subr.mxu0 0.0
        %973 = vmatpush1.xpose.msra.mxu0 0.0
        %974 = vmatprep.subr.mxu0 0.0
        %975 = vmatpush1.xpose.msra.mxu0 0.0
        %976 = vmatprep.subr.mxu0 0.0
        %977 = vmatpush1.xpose.msra.mxu0 0.0
        %978 = vmatprep.subr.mxu0 0.0
        %979 = vmatpush1.xpose.msra.mxu0 0.0
        %980 = vmatprep.subr.mxu0 0.0
        %981 = vmatpush1.xpose.msra.mxu0 0.0
        %982 = vmatprep.subr.mxu0 0.0
        %983 = vmatpush1.xpose.msra.mxu0 %v950
        %984 = vmatprep.subr.mxu0 0.0
        %985 = vmatpush2.xpose.msra.mxu0 0.0
        %986 = vmatprep.subr.mxu0 0.0
        %987 = vmatpush2.xpose.msra.mxu0 0.0
        %988 = vmatprep.subr.mxu0 0.0
        %989 = vmatpush2.xpose.msra.mxu0 0.0
        %990 = vmatprep.subr.mxu0 0.0
        %991 = vmatpush2.xpose.msra.mxu0 0.0
        %992 = vmatprep.subr.mxu0 0.0
        %993 = vmatpush2.xpose.msra.mxu0 0.0
        %994 = vmatprep.subr.mxu0 0.0
        %995 = vmatpush2.xpose.msra.mxu0 0.0
        %996 = vmatprep.subr.mxu0 0.0
        %997 = vmatpush2.xpose.msra.mxu0 0.0
        %998 = vmatprep.subr.mxu0 0.0
        %999 = vmatpush2.xpose.msra.mxu0 0.0
        %1000 = vmatprep.subr.mxu0 0.0
        %1001 = vmatpush2.xpose.msra.mxu0 0.0
        %1002 = vmatprep.subr.mxu0 0.0
        %1003 = vmatpush2.xpose.msra.mxu0 0.0
        %1004 = vmatprep.subr.mxu0 0.0
        %1005 = vmatpush2.xpose.msra.mxu0 0.0
        %1006 = vmatprep.subr.mxu0 0.0
        %1007 = vmatpush2.xpose.msra.mxu0 0.0
        %1008 = vmatprep.subr.mxu0 0.0
        %1009 = vmatpush2.xpose.msra.mxu0 0.0
        %1010 = vmatprep.subr.mxu0 0.0
        %1011 = vmatpush2.xpose.msra.mxu0 0.0
        %1012 = vmatprep.subr.mxu0 0.0
        %1013 = vmatpush2.xpose.msra.mxu0 0.0
        %1014 = vmatprep.subr.mxu0 0.0
        %1015 = vmatpush2.xpose.msra.mxu0 0.0
        %1016 = vmatprep.mubr.f32.mxu0 0.0
        %1017 = vmatmul.mubr.f32.gmra.mxu0 %v948
        %v1018 = vpop.f32.mrf.mxu0
        %v1019 = vadd.f32 0.0, %v1018
        %v1020 = vpop.f32.mrf.mxu0
        %1021 = vdwg.mxu0
        %v1022 = vmul.f32 %v1019, 0.17677669
        %v1023 = vsel %vm458, -1e+18, %v1022
        %v1024 = vsel %vm462, %v1023, -inf
        %1025 = vmax.xlane.f32.xlu0 %v1024
        %v1026 = vpop.xlane.xlu0 %1025
        %v1027 = vsub.f32 %v1023, %v1026
        %v1028 = vmul.f32 %v1027, 1.442695
        %v1029 = vpow.pop %v1028
        %v1030 = vsel %vm462, %v1029, 0.0
        %1031 = vadd.xlane.f32.xlu0 %v1030
        %v1032 = vpop.xlane.xlu0 %1031
        %v1033 = vrcp.pop %v1032
        %v1034 = vmul.f32 %v1029, %v1033
        %s1035 = scalar_lea.vmem %s370, 16 [#allocation11]
        %1036 = vst.msk [vmem:[%s1035] sm:$0xff] %vm462, %v1034
        %1037 = vrot.lane.b32.xlu0 %v454, 48
        %v1038 = vpop.permute.xlu0 %1037
        %v1041 = vsel %vm462, %v1034, 0
        %1043 = vmatprep.subr.mxu0 0.0
        %1044 = vmatpush1.msra.mxu0 0.0
        %1045 = vmatprep.subr.mxu0 0.0
        %1046 = vmatpush1.msra.mxu0 0.0
        %1047 = vmatprep.subr.mxu0 0.0
        %1048 = vmatpush1.msra.mxu0 0.0
        %1049 = vmatprep.subr.mxu0 0.0
        %1050 = vmatpush1.msra.mxu0 0.0
        %1051 = vmatprep.subr.mxu0 0.0
        %1052 = vmatpush1.msra.mxu0 0.0
        %1053 = vmatprep.subr.mxu0 0.0
        %1054 = vmatpush1.msra.mxu0 0.0
        %1055 = vmatprep.subr.mxu0 0.0
        %1056 = vmatpush1.msra.mxu0 0.0
        %1057 = vmatprep.subr.mxu0 0.0
        %1058 = vmatpush1.msra.mxu0 0.0
        %1059 = vmatprep.subr.mxu0 0.0
        %1060 = vmatpush1.msra.mxu0 0.0
        %1061 = vmatprep.subr.mxu0 0.0
        %1062 = vmatpush1.msra.mxu0 0.0
        %1063 = vmatprep.subr.mxu0 0.0
        %1064 = vmatpush1.msra.mxu0 0.0
        %1065 = vmatprep.subr.mxu0 0.0
        %1066 = vmatpush1.msra.mxu0 0.0
        %1067 = vmatprep.subr.mxu0 0.0
        %1068 = vmatpush1.msra.mxu0 0.0
        %1069 = vmatprep.subr.mxu0 0.0
        %1070 = vmatpush1.msra.mxu0 0.0
        %1071 = vmatprep.subr.mxu0 0.0
        %1072 = vmatpush1.msra.mxu0 0.0
        %1073 = vmatprep.subr.mxu0 0.0
        %1074 = vmatpush1.msra.mxu0 %v1038
        %1075 = vmatprep.subr.mxu0 0.0
        %1076 = vmatpush2.msra.mxu0 0.0
        %1077 = vmatprep.subr.mxu0 0.0
        %1078 = vmatpush2.msra.mxu0 0.0
        %1079 = vmatprep.subr.mxu0 0.0
        %1080 = vmatpush2.msra.mxu0 0.0
        %1081 = vmatprep.subr.mxu0 0.0
        %1082 = vmatpush2.msra.mxu0 0.0
        %1083 = vmatprep.subr.mxu0 0.0
        %1084 = vmatpush2.msra.mxu0 0.0
        %1085 = vmatprep.subr.mxu0 0.0
        %1086 = vmatpush2.msra.mxu0 0.0
        %1087 = vmatprep.subr.mxu0 0.0
        %1088 = vmatpush2.msra.mxu0 0.0
        %1089 = vmatprep.subr.mxu0 0.0
        %1090 = vmatpush2.msra.mxu0 0.0
        %1091 = vmatprep.subr.mxu0 0.0
        %1092 = vmatpush2.msra.mxu0 0.0
        %1093 = vmatprep.subr.mxu0 0.0
        %1094 = vmatpush2.msra.mxu0 0.0
        %1095 = vmatprep.subr.mxu0 0.0
        %1096 = vmatpush2.msra.mxu0 0.0
        %1097 = vmatprep.subr.mxu0 0.0
        %1098 = vmatpush2.msra.mxu0 0.0
        %1099 = vmatprep.subr.mxu0 0.0
        %1100 = vmatpush2.msra.mxu0 0.0
        %1101 = vmatprep.subr.mxu0 0.0
        %1102 = vmatpush2.msra.mxu0 0.0
        %1103 = vmatprep.subr.mxu0 0.0
        %1104 = vmatpush2.msra.mxu0 0.0
        %1105 = vmatprep.subr.mxu0 0.0
        %1106 = vmatpush2.msra.mxu0 0.0
        %1107 = vmatprep.mubr.f32.mxu0 0.0
        %1108 = vmatmul.mubr.f32.gmra.mxu0 %v1041
        %v1109 = vpop.f32.mrf.mxu0
        %v1110 = vadd.f32 0.0, %v1109
        %v1111 = vpop.f32.mrf.mxu0
        %1112 = vdwg.mxu0
        %v1113 = vld [vmem:[#allocation8 + $0x10] sm:$0xff]
        %v1115 = vsel %vm462, %v1110, 0
        %1117 = vmatprep.subr.mxu0 0.0
        %1118 = vmatpush1.msra.mxu0 0.0
        %1119 = vmatprep.subr.mxu0 0.0
        %1120 = vmatpush1.msra.mxu0 0.0
        %1121 = vmatprep.subr.mxu0 0.0
        %1122 = vmatpush1.msra.mxu0 0.0
        %1123 = vmatprep.subr.mxu0 0.0
        %1124 = vmatpush1.msra.mxu0 0.0
        %1125 = vmatprep.subr.mxu0 0.0
        %1126 = vmatpush1.msra.mxu0 0.0
        %1127 = vmatprep.subr.mxu0 0.0
        %1128 = vmatpush1.msra.mxu0 0.0
        %1129 = vmatprep.subr.mxu0 0.0
        %1130 = vmatpush1.msra.mxu0 0.0
        %1131 = vmatprep.subr.mxu0 0.0
        %1132 = vmatpush1.msra.mxu0 0.0
        %1133 = vmatprep.subr.mxu0 0.0
        %1134 = vmatpush1.msra.mxu0 0.0
        %1135 = vmatprep.subr.mxu0 0.0
        %1136 = vmatpush1.msra.mxu0 0.0
        %1137 = vmatprep.subr.mxu0 0.0
        %1138 = vmatpush1.msra.mxu0 0.0
        %1139 = vmatprep.subr.mxu0 0.0
        %1140 = vmatpush1.msra.mxu0 0.0
        %1141 = vmatprep.subr.mxu0 0.0
        %1142 = vmatpush1.msra.mxu0 0.0
        %1143 = vmatprep.subr.mxu0 0.0
        %1144 = vmatpush1.msra.mxu0 0.0
        %1145 = vmatprep.subr.mxu0 0.0
        %1146 = vmatpush1.msra.mxu0 0.0
        %1147 = vmatprep.subr.mxu0 0.0
        %1148 = vmatpush1.msra.mxu0 %v1113
        %1149 = vmatprep.subr.mxu0 0.0
        %1150 = vmatpush2.msra.mxu0 0.0
        %1151 = vmatprep.subr.mxu0 0.0
        %1152 = vmatpush2.msra.mxu0 0.0
        %1153 = vmatprep.subr.mxu0 0.0
        %1154 = vmatpush2.msra.mxu0 0.0
        %1155 = vmatprep.subr.mxu0 0.0
        %1156 = vmatpush2.msra.mxu0 0.0
        %1157 = vmatprep.subr.mxu0 0.0
        %1158 = vmatpush2.msra.mxu0 0.0
        %1159 = vmatprep.subr.mxu0 0.0
        %1160 = vmatpush2.msra.mxu0 0.0
        %1161 = vmatprep.subr.mxu0 0.0
        %1162 = vmatpush2.msra.mxu0 0.0
        %1163 = vmatprep.subr.mxu0 0.0
        %1164 = vmatpush2.msra.mxu0 0.0
        %1165 = vmatprep.subr.mxu0 0.0
        %1166 = vmatpush2.msra.mxu0 0.0
        %1167 = vmatprep.subr.mxu0 0.0
        %1168 = vmatpush2.msra.mxu0 0.0
        %1169 = vmatprep.subr.mxu0 0.0
        %1170 = vmatpush2.msra.mxu0 0.0
        %1171 = vmatprep.subr.mxu0 0.0
        %1172 = vmatpush2.msra.mxu0 0.0
        %1173 = vmatprep.subr.mxu0 0.0
        %1174 = vmatpush2.msra.mxu0 0.0
        %1175 = vmatprep.subr.mxu0 0.0
        %1176 = vmatpush2.msra.mxu0 0.0
        %1177 = vmatprep.subr.mxu0 0.0
        %1178 = vmatpush2.msra.mxu0 0.0
        %1179 = vmatprep.subr.mxu0 0.0
        %1180 = vmatpush2.msra.mxu0 0.0
        %1181 = vmatprep.mubr.f32.mxu0 0.0
        %1182 = vmatmul.mubr.f32.gmra.mxu0 %v1115
        %v1183 = vpop.f32.mrf.mxu0
        %v1184 = vadd.f32 0.0, %v1183
        %v1185 = vpop.f32.mrf.mxu0
        %1186 = vdwg.mxu0
        %v1187 = vadd.f32 %v941, %v1184
        %1188 = vrot.lane.b32.xlu0 %v454, 104
        %v1189 = vpop.permute.xlu0 %1188
        %1190 = vrot.lane.b32.xlu0 %v454, 72
        %v1191 = vpop.permute.xlu0 %1190
        %v1192 = vsel %vm462, %v1189, 0
        %v1194 = vsel %vm462, %v1191, 0
        %1196 = vmatprep.subr.mxu0 0.0
        %1197 = vmatpush1.xpose.msra.mxu0 0.0
        %1198 = vmatprep.subr.mxu0 0.0
        %1199 = vmatpush1.xpose.msra.mxu0 0.0
        %1200 = vmatprep.subr.mxu0 0.0
        %1201 = vmatpush1.xpose.msra.mxu0 0.0
        %1202 = vmatprep.subr.mxu0 0.0
        %1203 = vmatpush1.xpose.msra.mxu0 0.0
        %1204 = vmatprep.subr.mxu0 0.0
        %1205 = vmatpush1.xpose.msra.mxu0 0.0
        %1206 = vmatprep.subr.mxu0 0.0
        %1207 = vmatpush1.xpose.msra.mxu0 0.0
        %1208 = vmatprep.subr.mxu0 0.0
        %1209 = vmatpush1.xpose.msra.mxu0 0.0
        %1210 = vmatprep.subr.mxu0 0.0
        %1211 = vmatpush1.xpose.msra.mxu0 0.0
        %1212 = vmatprep.subr.mxu0 0.0
        %1213 = vmatpush1.xpose.msra.mxu0 0.0
        %1214 = vmatprep.subr.mxu0 0.0
        %1215 = vmatpush1.xpose.msra.mxu0 0.0
        %1216 = vmatprep.subr.mxu0 0.0
        %1217 = vmatpush1.xpose.msra.mxu0 0.0
        %1218 = vmatprep.subr.mxu0 0.0
        %1219 = vmatpush1.xpose.msra.mxu0 0.0
        %1220 = vmatprep.subr.mxu0 0.0
        %1221 = vmatpush1.xpose.msra.mxu0 0.0
        %1222 = vmatprep.subr.mxu0 0.0
        %1223 = vmatpush1.xpose.msra.mxu0 0.0
        %1224 = vmatprep.subr.mxu0 0.0
        %1225 = vmatpush1.xpose.msra.mxu0 0.0
        %1226 = vmatprep.subr.mxu0 0.0
        %1227 = vmatpush1.xpose.msra.mxu0 %v1194
        %1228 = vmatprep.subr.mxu0 0.0
        %1229 = vmatpush2.xpose.msra.mxu0 0.0
        %1230 = vmatprep.subr.mxu0 0.0
        %1231 = vmatpush2.xpose.msra.mxu0 0.0
        %1232 = vmatprep.subr.mxu0 0.0
        %1233 = vmatpush2.xpose.msra.mxu0 0.0
        %1234 = vmatprep.subr.mxu0 0.0
        %1235 = vmatpush2.xpose.msra.mxu0 0.0
        %1236 = vmatprep.subr.mxu0 0.0
        %1237 = vmatpush2.xpose.msra.mxu0 0.0
        %1238 = vmatprep.subr.mxu0 0.0
        %1239 = vmatpush2.xpose.msra.mxu0 0.0
        %1240 = vmatprep.subr.mxu0 0.0
        %1241 = vmatpush2.xpose.msra.mxu0 0.0
        %1242 = vmatprep.subr.mxu0 0.0
        %1243 = vmatpush2.xpose.msra.mxu0 0.0
        %1244 = vmatprep.subr.mxu0 0.0
        %1245 = vmatpush2.xpose.msra.mxu0 0.0
        %1246 = vmatprep.subr.mxu0 0.0
        %1247 = vmatpush2.xpose.msra.mxu0 0.0
        %1248 = vmatprep.subr.mxu0 0.0
        %1249 = vmatpush2.xpose.msra.mxu0 0.0
        %1250 = vmatprep.subr.mxu0 0.0
        %1251 = vmatpush2.xpose.msra.mxu0 0.0
        %1252 = vmatprep.subr.mxu0 0.0
        %1253 = vmatpush2.xpose.msra.mxu0 0.0
        %1254 = vmatprep.subr.mxu0 0.0
        %1255 = vmatpush2.xpose.msra.mxu0 0.0
        %1256 = vmatprep.subr.mxu0 0.0
        %1257 = vmatpush2.xpose.msra.mxu0 0.0
        %1258 = vmatprep.subr.mxu0 0.0
        %1259 = vmatpush2.xpose.msra.mxu0 0.0
        %1260 = vmatprep.mubr.f32.mxu0 0.0
        %1261 = vmatmul.mubr.f32.gmra.mxu0 %v1192
        %v1262 = vpop.f32.mrf.mxu0
        %v1263 = vadd.f32 0.0, %v1262
        %v1264 = vpop.f32.mrf.mxu0
        %1265 = vdwg.mxu0
        %v1266 = vmul.f32 %v1263, 0.17677669
        %v1267 = vsel %vm458, -1e+18, %v1266
        %v1268 = vsel %vm462, %v1267, -inf
        %1269 = vmax.xlane.f32.xlu0 %v1268
        %v1270 = vpop.xlane.xlu0 %1269
        %v1271 = vsub.f32 %v1267, %v1270
        %v1272 = vmul.f32 %v1271, 1.442695
        %v1273 = vpow.pop %v1272
        %v1274 = vsel %vm462, %v1273, 0.0
        %1275 = vadd.xlane.f32.xlu0 %v1274
        %v1276 = vpop.xlane.xlu0 %1275
        %v1277 = vrcp.pop %v1276
        %v1278 = vmul.f32 %v1273, %v1277
        %s1279 = scalar_lea.vmem %s370, 24 [#allocation11]
        %1280 = vst.msk [vmem:[%s1279] sm:$0xff] %vm462, %v1278
        %1281 = vrot.lane.b32.xlu0 %v454, 40
        %v1282 = vpop.permute.xlu0 %1281
        %v1285 = vsel %vm462, %v1278, 0
        %1287 = vmatprep.subr.mxu0 0.0
        %1288 = vmatpush1.msra.mxu0 0.0
        %1289 = vmatprep.subr.mxu0 0.0
        %1290 = vmatpush1.msra.mxu0 0.0
        %1291 = vmatprep.subr.mxu0 0.0
        %1292 = vmatpush1.msra.mxu0 0.0
        %1293 = vmatprep.subr.mxu0 0.0
        %1294 = vmatpush1.msra.mxu0 0.0
        %1295 = vmatprep.subr.mxu0 0.0
        %1296 = vmatpush1.msra.mxu0 0.0
        %1297 = vmatprep.subr.mxu0 0.0
        %1298 = vmatpush1.msra.mxu0 0.0
        %1299 = vmatprep.subr.mxu0 0.0
        %1300 = vmatpush1.msra.mxu0 0.0
        %1301 = vmatprep.subr.mxu0 0.0
        %1302 = vmatpush1.msra.mxu0 0.0
        %1303 = vmatprep.subr.mxu0 0.0
        %1304 = vmatpush1.msra.mxu0 0.0
        %1305 = vmatprep.subr.mxu0 0.0
        %1306 = vmatpush1.msra.mxu0 0.0
        %1307 = vmatprep.subr.mxu0 0.0
        %1308 = vmatpush1.msra.mxu0 0.0
        %1309 = vmatprep.subr.mxu0 0.0
        %1310 = vmatpush1.msra.mxu0 0.0
        %1311 = vmatprep.subr.mxu0 0.0
        %1312 = vmatpush1.msra.mxu0 0.0
        %1313 = vmatprep.subr.mxu0 0.0
        %1314 = vmatpush1.msra.mxu0 0.0
        %1315 = vmatprep.subr.mxu0 0.0
        %1316 = vmatpush1.msra.mxu0 0.0
        %1317 = vmatprep.subr.mxu0 0.0
        %1318 = vmatpush1.msra.mxu0 %v1282
        %1319 = vmatprep.subr.mxu0 0.0
        %1320 = vmatpush2.msra.mxu0 0.0
        %1321 = vmatprep.subr.mxu0 0.0
        %1322 = vmatpush2.msra.mxu0 0.0
        %1323 = vmatprep.subr.mxu0 0.0
        %1324 = vmatpush2.msra.mxu0 0.0
        %1325 = vmatprep.subr.mxu0 0.0
        %1326 = vmatpush2.msra.mxu0 0.0
        %1327 = vmatprep.subr.mxu0 0.0
        %1328 = vmatpush2.msra.mxu0 0.0
        %1329 = vmatprep.subr.mxu0 0.0
        %1330 = vmatpush2.msra.mxu0 0.0
        %1331 = vmatprep.subr.mxu0 0.0
        %1332 = vmatpush2.msra.mxu0 0.0
        %1333 = vmatprep.subr.mxu0 0.0
        %1334 = vmatpush2.msra.mxu0 0.0
        %1335 = vmatprep.subr.mxu0 0.0
        %1336 = vmatpush2.msra.mxu0 0.0
        %1337 = vmatprep.subr.mxu0 0.0
        %1338 = vmatpush2.msra.mxu0 0.0
        %1339 = vmatprep.subr.mxu0 0.0
        %1340 = vmatpush2.msra.mxu0 0.0
        %1341 = vmatprep.subr.mxu0 0.0
        %1342 = vmatpush2.msra.mxu0 0.0
        %1343 = vmatprep.subr.mxu0 0.0
        %1344 = vmatpush2.msra.mxu0 0.0
        %1345 = vmatprep.subr.mxu0 0.0
        %1346 = vmatpush2.msra.mxu0 0.0
        %1347 = vmatprep.subr.mxu0 0.0
        %1348 = vmatpush2.msra.mxu0 0.0
        %1349 = vmatprep.subr.mxu0 0.0
        %1350 = vmatpush2.msra.mxu0 0.0
        %1351 = vmatprep.mubr.f32.mxu0 0.0
        %1352 = vmatmul.mubr.f32.gmra.mxu0 %v1285
        %v1353 = vpop.f32.mrf.mxu0
        %v1354 = vadd.f32 0.0, %v1353
        %v1355 = vpop.f32.mrf.mxu0
        %1356 = vdwg.mxu0
        %v1357 = vld [vmem:[#allocation8 + $0x18] sm:$0xff]
        %v1359 = vsel %vm462, %v1354, 0
        %1361 = vmatprep.subr.mxu0 0.0
        %1362 = vmatpush1.msra.mxu0 0.0
        %1363 = vmatprep.subr.mxu0 0.0
        %1364 = vmatpush1.msra.mxu0 0.0
        %1365 = vmatprep.subr.mxu0 0.0
        %1366 = vmatpush1.msra.mxu0 0.0
        %1367 = vmatprep.subr.mxu0 0.0
        %1368 = vmatpush1.msra.mxu0 0.0
        %1369 = vmatprep.subr.mxu0 0.0
        %1370 = vmatpush1.msra.mxu0 0.0
        %1371 = vmatprep.subr.mxu0 0.0
        %1372 = vmatpush1.msra.mxu0 0.0
        %1373 = vmatprep.subr.mxu0 0.0
        %1374 = vmatpush1.msra.mxu0 0.0
        %1375 = vmatprep.subr.mxu0 0.0
        %1376 = vmatpush1.msra.mxu0 0.0
        %1377 = vmatprep.subr.mxu0 0.0
        %1378 = vmatpush1.msra.mxu0 0.0
        %1379 = vmatprep.subr.mxu0 0.0
        %1380 = vmatpush1.msra.mxu0 0.0
        %1381 = vmatprep.subr.mxu0 0.0
        %1382 = vmatpush1.msra.mxu0 0.0
        %1383 = vmatprep.subr.mxu0 0.0
        %1384 = vmatpush1.msra.mxu0 0.0
        %1385 = vmatprep.subr.mxu0 0.0
        %1386 = vmatpush1.msra.mxu0 0.0
        %1387 = vmatprep.subr.mxu0 0.0
        %1388 = vmatpush1.msra.mxu0 0.0
        %1389 = vmatprep.subr.mxu0 0.0
        %1390 = vmatpush1.msra.mxu0 0.0
        %1391 = vmatprep.subr.mxu0 0.0
        %1392 = vmatpush1.msra.mxu0 %v1357
        %1393 = vmatprep.subr.mxu0 0.0
        %1394 = vmatpush2.msra.mxu0 0.0
        %1395 = vmatprep.subr.mxu0 0.0
        %1396 = vmatpush2.msra.mxu0 0.0
        %1397 = vmatprep.subr.mxu0 0.0
        %1398 = vmatpush2.msra.mxu0 0.0
        %1399 = vmatprep.subr.mxu0 0.0
        %1400 = vmatpush2.msra.mxu0 0.0
        %1401 = vmatprep.subr.mxu0 0.0
        %1402 = vmatpush2.msra.mxu0 0.0
        %1403 = vmatprep.subr.mxu0 0.0
        %1404 = vmatpush2.msra.mxu0 0.0
        %1405 = vmatprep.subr.mxu0 0.0
        %1406 = vmatpush2.msra.mxu0 0.0
        %1407 = vmatprep.subr.mxu0 0.0
        %1408 = vmatpush2.msra.mxu0 0.0
        %1409 = vmatprep.subr.mxu0 0.0
        %1410 = vmatpush2.msra.mxu0 0.0
        %1411 = vmatprep.subr.mxu0 0.0
        %1412 = vmatpush2.msra.mxu0 0.0
        %1413 = vmatprep.subr.mxu0 0.0
        %1414 = vmatpush2.msra.mxu0 0.0
        %1415 = vmatprep.subr.mxu0 0.0
        %1416 = vmatpush2.msra.mxu0 0.0
        %1417 = vmatprep.subr.mxu0 0.0
        %1418 = vmatpush2.msra.mxu0 0.0
        %1419 = vmatprep.subr.mxu0 0.0
        %1420 = vmatpush2.msra.mxu0 0.0
        %1421 = vmatprep.subr.mxu0 0.0
        %1422 = vmatpush2.msra.mxu0 0.0
        %1423 = vmatprep.subr.mxu0 0.0
        %1424 = vmatpush2.msra.mxu0 0.0
        %1425 = vmatprep.mubr.f32.mxu0 0.0
        %1426 = vmatmul.mubr.f32.gmra.mxu0 %v1359
        %v1427 = vpop.f32.mrf.mxu0
        %v1428 = vadd.f32 0.0, %v1427
        %v1429 = vpop.f32.mrf.mxu0
        %1430 = vdwg.mxu0
        %v1431 = vadd.f32 %v1187, %v1428
        %v1432 = vld [vmem:[%s5] sm:$0x1]
        %v1434 = vlaneseq
        %v1435 = vshrl.u32 %v1434, 7
        %v1436 = vsub.s32 0, %v1435
        %v1437 = vrot.slane %v1432, %v1436
        %v1439 = vadd.f32 %v1431, %v1437
        %1440 = vst.msk [vmem:[%s363] sm:$0xff] %vm383, %v1439
        %s1441 = sand.u32 %s176, 1
        %s1442 = scalar_lea.sflag [#allocation4], %s1441
        %s1443 = sand.u32 %s176, 1
        %s1444 = smul.addr %s1443, 8
        %s1445 = scalar_lea.vmem [#allocation10], %s1444
        %s1446 = sand.u32 %s202, 1
        %s1447 = scalar_lea.sflag [#allocation12], %s1446
        %s1448 = sand.u32 %s202, 1
        %s1449 = smul.addr %s1448, 32
        %s1450 = scalar_lea.vmem [#allocation11], %s1449
        // Predicated region
        $region61: #{tpu_custom_call.1} parent=43 // pred_check
          %p1451 = pneg %p186
        $region62: #{tpu_custom_call.1} parent=43 // pred_check_branch
          %1453 = sbr.rel (%p1451) target = $region64
        $region63: #{tpu_custom_call.1} parent=43 // pred_region
          %s1455 = ssub.s32 128, 128
          %1456 = vsyncadd %s1442, %s1455
          %s1457 = smul.addr %s32, 128
          %s1458 = scalar_lea.hbm %s6, %s1457
          %s1460 = sshll.u32 %s1445, 4
          %s1461 = int_to_ptr.vmem [resolvable:$true] %s1460
          %1463 = dma.vmem_to_hbm [thread:$0]  %s1461, 128, %s1458, %s1442
        $region64: #{tpu_custom_call.1} parent=43 // pred_fallthru
          _
        // Predicated region
        $region65: #{tpu_custom_call.1} parent=43 // pred_check
          %p1464 = pneg %p212
        $region66: #{tpu_custom_call.1} parent=43 // pred_check_branch
          %1466 = sbr.rel (%p1464) target = $region68
        $region67: #{tpu_custom_call.1} parent=43 // pred_region
          %s1468 = ssub.s32 512, 512
          %1469 = vsyncadd %s1447, %s1468
          %s1470 = smul.addr %s32, 128
          %s1471 = scalar_lea.hbm %s7, %s1470
          %s1472 = sshll.u32 %s1450, 4
          %s1473 = int_to_ptr.vmem [resolvable:$true] %s1472
          %1478 = dma.vmem_to_hbm [thread:$0]  %s1473, 512, %s1471, %s1447, 128, 256, 8
        $region68: #{tpu_custom_call.1} parent=43 // pred_fallthru
          _
      $region44: #{tpu_custom_call.1} parent=5 // pred_fallthru
        _
      %p1479 = scmp.le.s32.totalorder 2, %s27
      // Predicated region
      $region69: #{tpu_custom_call.1} parent=5 // pred_check
        %p1480 = pneg %p1479
      $region70: #{tpu_custom_call.1} parent=5 // pred_check_branch
        %1482 = sbr.rel (%p1480) target = $region72
      $region71: #{tpu_custom_call.1} parent=5 // pred_region
        %s1483 = ssub.s32 %s27, 2
        // Predicated region
        $region73: #{tpu_custom_call.1} parent=71 // pred_check
          %p1484 = pneg %p192
        $region74: #{tpu_custom_call.1} parent=71 // pred_check_branch
          %1486 = sbr.rel (%p1484) target = $region76
        $region75: #{tpu_custom_call.1} parent=71 // pred_region
          %s1487 = sand.u32 %s177, 1
          %s1488 = scalar_lea.sflag [#allocation4], %s1487
          %s1489 = sand.u32 %s177, 1
          %s1490 = smul.addr %s1489, 8
          %s1491 = scalar_lea.vmem [#allocation10], %s1490
          %1492 = dma.done %s1488, 128
        $region76: #{tpu_custom_call.1} parent=71 // pred_fallthru
          _
        // Predicated region
        $region77: #{tpu_custom_call.1} parent=71 // pred_check
          %p1493 = pneg %p218
        $region78: #{tpu_custom_call.1} parent=71 // pred_check_branch
          %1495 = sbr.rel (%p1493) target = $region80
        $region79: #{tpu_custom_call.1} parent=71 // pred_region
          %s1496 = sand.u32 %s203, 1
          %s1497 = scalar_lea.sflag [#allocation12], %s1496
          %s1498 = sand.u32 %s203, 1
          %s1499 = smul.addr %s1498, 32
          %s1500 = scalar_lea.vmem [#allocation11], %s1499
          %1501 = dma.done %s1497, 512
        $region80: #{tpu_custom_call.1} parent=71 // pred_fallthru
          _
      $region72: #{tpu_custom_call.1} parent=5 // pred_fallthru
        _
    $region6: #{tpu_custom_call.1} parent=1 // loop_footer
      %s31 = sadd.s32 1, %s27
    $region7: #{tpu_custom_call.1} parent=1 // loop_footer_branch
      %26 = sbr.rel target = $region3
    $region8: #{tpu_custom_call.1} parent=1 // loop_exit
      _
    %1502 = vsyncpa [#allocation3], 1
    %s1503 = scalar_lea.sflag [#allocation3], 1
    %1504 = vsyncpa %s1503, 1
    %1505 = vsyncpa [#allocation6], 1
    %s1506 = scalar_lea.sflag [#allocation6], 1
    %1507 = vsyncpa %s1506, 1
    %1508 = vsyncpa [#allocation9], 1
    %1509 = vsyncpa [#allocation4], 1
    %s1510 = scalar_lea.sflag [#allocation4], 1
    %1511 = vsyncpa %s1510, 1
    %1512 = vsyncpa [#allocation12], 1
    %s1513 = scalar_lea.sflag [#allocation12], 1
    %1514 = vsyncpa %s1513, 1

</llo_original>
